<compile_context>
chip_gen: v5e
topology: v5e:2x2
jax: 0.10.0
libtpu: 0.0.40
codegen_flags: <defaults>
</compile_context>

<pallas_src>
import functools

import jax
import jax.numpy as jnp
from jax import lax
from jax.experimental import pallas as pl
from jax.experimental.pallas import tpu as pltpu


def _conv3x3_kernel(x_ref, w_ref, o_ref, *, th, w_out, cout):
    """Fused 3x3 conv for one batch element / one block of `th` output rows.

    x_ref: (3, 1, (H+2)*W, Cin)  kw-shifted, row-flattened padded NHWC images (bf16).
    w_ref: (9, Cin, Cout)        taps repacked as (kh*3+kw, ci, co) (bf16), resident.
    o_ref: (1, th*W, Cout)       output rows block (f32), true Cout width.
    """
    row0 = pl.program_id(1) * th
    acc = jnp.zeros((th * w_out, cout), jnp.float32)
    for kh in range(3):
        start = pl.multiple_of((row0 + kh) * w_out, w_out)
        for kw in range(3):
            patch = x_ref[kw, 0, pl.ds(start, th * w_out), :]          # (th*W, Cin)
            acc = acc + jnp.dot(patch, w_ref[kh * 3 + kw],
                                preferred_element_type=jnp.float32)
    o_ref[0] = acc.astype(o_ref.dtype)


def _pick_row_block(n, h, w, cin, cout, in_bytes=2, out_bytes=4,
                    budget_bytes=40 * 1024 * 1024):
    """Largest row block (divisor of H) whose double-buffered VMEM footprint fits the
    budget; prefers an even total grid-step count >= 2 (v7x megacore balance)."""
    def pad(v, m):
        return -(-v // m) * m

    # Per-step VMEM footprint, accounting for (sublane, lane) tile padding.
    x_block = 3 * pad((h + 2) * w, 16) * pad(cin, 128) * in_bytes      # resident / batch
    w_block = 9 * pad(cin, 16) * pad(cout, 128) * in_bytes

    def footprint(th):
        o_block = pad(th * w, 8) * pad(cout, 128) * out_bytes
        return 2 * (x_block + w_block + o_block)                       # double-buffered

    divisors = [d for d in range(h, 0, -1)
                if h % d == 0 and ((d * w) % 8 == 0 or d == h)]
    fitting = [d for d in divisors if footprint(d) <= budget_bytes] or [divisors[-1]]
    th = None
    for d in fitting:                          # largest first; prefer even step count
        steps = n * (h // d)
        if steps >= 2 and steps % 2 == 0:
            th = d
            break
    if th is None:
        th = next((d for d in fitting if n * (h // d) >= 2), fitting[0])
    vmem_limit = int(min(112 << 20, max(footprint(th) + (4 << 20), 16 << 20)))
    return th, vmem_limit


def conv_model_forward(x_nchw, weight_oihw):
    """y = conv2d(x, W, kernel=3, stride=1, padding=1, bias=False); NCHW in / NCHW out."""
    n, cin, h, w = x_nchw.shape
    cout = weight_oihw.shape[0]

    # ---- XLA glue (layout only, single small HBM passes) ----
    x_nhwc = jnp.transpose(x_nchw, (0, 2, 3, 1)).astype(jnp.bfloat16)
    x_pad = jnp.pad(x_nhwc, ((0, 0), (1, 1), (1, 1), (0, 0)))          # (n, h+2, w+2, cin)
    # Three kw-shifted views with rows flattened -> aligned in-kernel row slicing.
    x_taps = jnp.stack([x_pad[:, :, kw:kw + w, :] for kw in range(3)])
    x_taps = x_taps.reshape(3, n, (h + 2) * w, cin)
    # OIHW -> (kh, kw, ci, co) -> (9, Cin, Cout), bf16.
    w_taps = jnp.transpose(weight_oihw, (2, 3, 1, 0)).reshape(9, cin, cout)
    w_taps = w_taps.astype(jnp.bfloat16)

    th, vmem_limit = _pick_row_block(n, h, w, cin, cout)
    grid = (n, h // th)
    kernel = functools.partial(_conv3x3_kernel, th=th, w_out=w, cout=cout)

    out = pl.pallas_call(
        kernel,
        out_shape=jax.ShapeDtypeStruct((n, h * w, cout), jnp.float32),
        grid=grid,
        in_specs=[
            # Full padded image (3 kw views) resident per batch element; re-fetched only
            # when the batch index changes.
            pl.BlockSpec((3, 1, (h + 2) * w, cin), lambda ni, ri: (0, ni, 0, 0)),
            # Repacked weights resident for the whole grid.
            pl.BlockSpec((9, cin, cout), lambda ni, ri: (0, 0, 0)),
        ],
        out_specs=pl.BlockSpec((1, th * w, cout), lambda ni, ri: (ni, ri, 0)),
        compiler_params=pltpu.CompilerParams(
            dimension_semantics=("parallel", "parallel"),
            vmem_limit_bytes=vmem_limit),
    )(x_taps, w_taps)

    y = out.reshape(n, h, w, cout)
    return jnp.transpose(y, (0, 3, 1, 2)).astype(x_nchw.dtype)


if __name__ == "__main__":
    # Small shapes consistent with the module: batch=2, c_in=4, c_out=8, 16x16 spatial.
    N, C_IN, C_OUT, H, W = 2, 4, 8, 16, 16

    key = jax.random.PRNGKey(0)
    k_x, k_w = jax.random.split(key)
    x = jax.random.normal(k_x, (N, C_IN, H, W), dtype=jnp.float32)
    fan_in = C_IN * 3 * 3
    weight = jax.random.normal(k_w, (C_OUT, C_IN, 3, 3), dtype=jnp.float32) / jnp.sqrt(fan_in)

    y = jax.block_until_ready(conv_model_forward(x, weight))
    assert y.shape == (N, C_OUT, H, W)

    dn = ("NCHW", "OIHW", "NCHW")
    # Tight check vs. an f32 conv on bf16-quantized operands (matches the kernel's
    # bf16-operand / f32-accumulate arithmetic up to summation order).
    xq = x.astype(jnp.bfloat16).astype(jnp.float32)
    wq = weight.astype(jnp.bfloat16).astype(jnp.float32)
    y_ref_q = lax.conv_general_dilated(
        xq, wq, window_strides=(1, 1), padding=((1, 1), (1, 1)),
        dimension_numbers=dn, precision=lax.Precision.HIGHEST)
    err_q = float(jnp.max(jnp.abs(y - y_ref_q)))
    assert jnp.allclose(y, y_ref_q, atol=2e-3, rtol=2e-3), err_q

    # Loose sanity check vs. the full-f32 reference (bf16 operand quantization noise).
    y_ref = lax.conv_general_dilated(
        x, weight, window_strides=(1, 1), padding=((1, 1), (1, 1)),
        dimension_numbers=dn, precision=lax.Precision.HIGHEST)
    err = float(jnp.max(jnp.abs(y - y_ref)))
    assert jnp.allclose(y, y_ref, atol=5e-2, rtol=5e-2), err

    print("KERNEL_OK")
</pallas_src>

<mosaic_0001>
module attributes {stable_mosaic.version = 11 : i64} {
  func.func @_conv3x3_kernel(%arg0: i32, %arg1: i32, %arg2: memref<3x1x288x4xbf16, #tpu.memory_space<vmem>>, %arg3: memref<9x4x8xbf16, #tpu.memory_space<vmem>>, %arg4: memref<1x256x8xf32, #tpu.memory_space<vmem>>) attributes {dimension_semantics = [#tpu.dimension_semantics<parallel>, #tpu.dimension_semantics<parallel>], iteration_bounds = array<i64: 2, 1>, scalar_prefetch = 0 : i64, scratch_operands = 0 : i64, tpu.core_type = #tpu.core_type<tc>, window_params = [{transform_indices = @transform_0, window_bounds = array<i64: 3, 1, 288, 4>}, {pipeline_mode = #tpu.pipeline_mode<synchronous>, transform_indices = @transform_1, window_bounds = array<i64: 9, 4, 8>}, {transform_indices = @transform_2, window_bounds = array<i64: 1, 256, 8>}]} {
    %c16_i32 = arith.constant 16 : i32
    %0 = arith.muli %arg1, %c16_i32 : i32
    %cst = arith.constant 0.000000e+00 : f32
    %1 = vector.broadcast %cst : f32 to vector<256x8xf32>
    %c0_i32 = arith.constant 0 : i32
    %2 = arith.addi %0, %c0_i32 : i32
    %c16_i32_0 = arith.constant 16 : i32
    %3 = arith.muli %2, %c16_i32_0 : i32
    %4 = tpu.assume_multiple %3, 16 : i32
    %c0 = arith.constant 0 : index
    %c0_1 = arith.constant 0 : index
    %5 = arith.index_cast %4 : i32 to index
    %c0_2 = arith.constant 0 : index
    %6 = vector.load %arg2[%c0, %c0_1, %5, %c0_2] : memref<3x1x288x4xbf16, #tpu.memory_space<vmem>>, vector<1x1x256x4xbf16>
    %7 = vector.shape_cast %6 : vector<1x1x256x4xbf16> to vector<256x4xbf16>
    %c0_3 = arith.constant 0 : index
    %c0_4 = arith.constant 0 : index
    %c0_5 = arith.constant 0 : index
    %8 = vector.load %arg3[%c0_3, %c0_4, %c0_5] : memref<9x4x8xbf16, #tpu.memory_space<vmem>>, vector<1x4x8xbf16>
    %9 = vector.shape_cast %8 : vector<1x4x8xbf16> to vector<4x8xbf16>
    %cst_6 = arith.constant dense<0.000000e+00> : vector<256x8xf32>
    %10 = tpu.matmul %7, %9, %cst_6 {dimension_numbers = #tpu.dot_dimension_numbers<[1], [0], [0], [1], [0, 0, 1, 1], [], []>} : vector<256x4xbf16>, vector<4x8xbf16>, vector<256x8xf32> -> vector<256x8xf32>
    %11 = arith.addf %1, %10 : vector<256x8xf32>
    %c1 = arith.constant 1 : index
    %c0_7 = arith.constant 0 : index
    %12 = arith.index_cast %4 : i32 to index
    %c0_8 = arith.constant 0 : index
    %13 = vector.load %arg2[%c1, %c0_7, %12, %c0_8] : memref<3x1x288x4xbf16, #tpu.memory_space<vmem>>, vector<1x1x256x4xbf16>
    %14 = vector.shape_cast %13 : vector<1x1x256x4xbf16> to vector<256x4xbf16>
    %c1_9 = arith.constant 1 : index
    %c0_10 = arith.constant 0 : index
    %c0_11 = arith.constant 0 : index
    %15 = vector.load %arg3[%c1_9, %c0_10, %c0_11] : memref<9x4x8xbf16, #tpu.memory_space<vmem>>, vector<1x4x8xbf16>
    %16 = vector.shape_cast %15 : vector<1x4x8xbf16> to vector<4x8xbf16>
    %cst_12 = arith.constant dense<0.000000e+00> : vector<256x8xf32>
    %17 = tpu.matmul %14, %16, %cst_12 {dimension_numbers = #tpu.dot_dimension_numbers<[1], [0], [0], [1], [0, 0, 1, 1], [], []>} : vector<256x4xbf16>, vector<4x8xbf16>, vector<256x8xf32> -> vector<256x8xf32>
    %18 = arith.addf %11, %17 : vector<256x8xf32>
    %c2 = arith.constant 2 : index
    %c0_13 = arith.constant 0 : index
    %19 = arith.index_cast %4 : i32 to index
    %c0_14 = arith.constant 0 : index
    %20 = vector.load %arg2[%c2, %c0_13, %19, %c0_14] : memref<3x1x288x4xbf16, #tpu.memory_space<vmem>>, vector<1x1x256x4xbf16>
    %21 = vector.shape_cast %20 : vector<1x1x256x4xbf16> to vector<256x4xbf16>
    %c2_15 = arith.constant 2 : index
    %c0_16 = arith.constant 0 : index
    %c0_17 = arith.constant 0 : index
    %22 = vector.load %arg3[%c2_15, %c0_16, %c0_17] : memref<9x4x8xbf16, #tpu.memory_space<vmem>>, vector<1x4x8xbf16>
    %23 = vector.shape_cast %22 : vector<1x4x8xbf16> to vector<4x8xbf16>
    %cst_18 = arith.constant dense<0.000000e+00> : vector<256x8xf32>
    %24 = tpu.matmul %21, %23, %cst_18 {dimension_numbers = #tpu.dot_dimension_numbers<[1], [0], [0], [1], [0, 0, 1, 1], [], []>} : vector<256x4xbf16>, vector<4x8xbf16>, vector<256x8xf32> -> vector<256x8xf32>
    %25 = arith.addf %18, %24 : vector<256x8xf32>
    %c1_i32 = arith.constant 1 : i32
    %26 = arith.addi %0, %c1_i32 : i32
    %c16_i32_19 = arith.constant 16 : i32
    %27 = arith.muli %26, %c16_i32_19 : i32
    %28 = tpu.assume_multiple %27, 16 : i32
    %c0_20 = arith.constant 0 : index
    %c0_21 = arith.constant 0 : index
    %29 = arith.index_cast %28 : i32 to index
    %c0_22 = arith.constant 0 : index
    %30 = vector.load %arg2[%c0_20, %c0_21, %29, %c0_22] : memref<3x1x288x4xbf16, #tpu.memory_space<vmem>>, vector<1x1x256x4xbf16>
    %31 = vector.shape_cast %30 : vector<1x1x256x4xbf16> to vector<256x4xbf16>
    %c3 = arith.constant 3 : index
    %c0_23 = arith.constant 0 : index
    %c0_24 = arith.constant 0 : index
    %32 = vector.load %arg3[%c3, %c0_23, %c0_24] : memref<9x4x8xbf16, #tpu.memory_space<vmem>>, vector<1x4x8xbf16>
    %33 = vector.shape_cast %32 : vector<1x4x8xbf16> to vector<4x8xbf16>
    %cst_25 = arith.constant dense<0.000000e+00> : vector<256x8xf32>
    %34 = tpu.matmul %31, %33, %cst_25 {dimension_numbers = #tpu.dot_dimension_numbers<[1], [0], [0], [1], [0, 0, 1, 1], [], []>} : vector<256x4xbf16>, vector<4x8xbf16>, vector<256x8xf32> -> vector<256x8xf32>
    %35 = arith.addf %25, %34 : vector<256x8xf32>
    %c1_26 = arith.constant 1 : index
    %c0_27 = arith.constant 0 : index
    %36 = arith.index_cast %28 : i32 to index
    %c0_28 = arith.constant 0 : index
    %37 = vector.load %arg2[%c1_26, %c0_27, %36, %c0_28] : memref<3x1x288x4xbf16, #tpu.memory_space<vmem>>, vector<1x1x256x4xbf16>
    %38 = vector.shape_cast %37 : vector<1x1x256x4xbf16> to vector<256x4xbf16>
    %c4 = arith.constant 4 : index
    %c0_29 = arith.constant 0 : index
    %c0_30 = arith.constant 0 : index
    %39 = vector.load %arg3[%c4, %c0_29, %c0_30] : memref<9x4x8xbf16, #tpu.memory_space<vmem>>, vector<1x4x8xbf16>
    %40 = vector.shape_cast %39 : vector<1x4x8xbf16> to vector<4x8xbf16>
    %cst_31 = arith.constant dense<0.000000e+00> : vector<256x8xf32>
    %41 = tpu.matmul %38, %40, %cst_31 {dimension_numbers = #tpu.dot_dimension_numbers<[1], [0], [0], [1], [0, 0, 1, 1], [], []>} : vector<256x4xbf16>, vector<4x8xbf16>, vector<256x8xf32> -> vector<256x8xf32>
    %42 = arith.addf %35, %41 : vector<256x8xf32>
    %c2_32 = arith.constant 2 : index
    %c0_33 = arith.constant 0 : index
    %43 = arith.index_cast %28 : i32 to index
    %c0_34 = arith.constant 0 : index
    %44 = vector.load %arg2[%c2_32, %c0_33, %43, %c0_34] : memref<3x1x288x4xbf16, #tpu.memory_space<vmem>>, vector<1x1x256x4xbf16>
    %45 = vector.shape_cast %44 : vector<1x1x256x4xbf16> to vector<256x4xbf16>
    %c5 = arith.constant 5 : index
    %c0_35 = arith.constant 0 : index
    %c0_36 = arith.constant 0 : index
    %46 = vector.load %arg3[%c5, %c0_35, %c0_36] : memref<9x4x8xbf16, #tpu.memory_space<vmem>>, vector<1x4x8xbf16>
    %47 = vector.shape_cast %46 : vector<1x4x8xbf16> to vector<4x8xbf16>
    %cst_37 = arith.constant dense<0.000000e+00> : vector<256x8xf32>
    %48 = tpu.matmul %45, %47, %cst_37 {dimension_numbers = #tpu.dot_dimension_numbers<[1], [0], [0], [1], [0, 0, 1, 1], [], []>} : vector<256x4xbf16>, vector<4x8xbf16>, vector<256x8xf32> -> vector<256x8xf32>
    %49 = arith.addf %42, %48 : vector<256x8xf32>
    %c2_i32 = arith.constant 2 : i32
    %50 = arith.addi %0, %c2_i32 : i32
    %c16_i32_38 = arith.constant 16 : i32
    %51 = arith.muli %50, %c16_i32_38 : i32
    %52 = tpu.assume_multiple %51, 16 : i32
    %c0_39 = arith.constant 0 : index
    %c0_40 = arith.constant 0 : index
    %53 = arith.index_cast %52 : i32 to index
    %c0_41 = arith.constant 0 : index
    %54 = vector.load %arg2[%c0_39, %c0_40, %53, %c0_41] : memref<3x1x288x4xbf16, #tpu.memory_space<vmem>>, vector<1x1x256x4xbf16>
    %55 = vector.shape_cast %54 : vector<1x1x256x4xbf16> to vector<256x4xbf16>
    %c6 = arith.constant 6 : index
    %c0_42 = arith.constant 0 : index
    %c0_43 = arith.constant 0 : index
    %56 = vector.load %arg3[%c6, %c0_42, %c0_43] : memref<9x4x8xbf16, #tpu.memory_space<vmem>>, vector<1x4x8xbf16>
    %57 = vector.shape_cast %56 : vector<1x4x8xbf16> to vector<4x8xbf16>
    %cst_44 = arith.constant dense<0.000000e+00> : vector<256x8xf32>
    %58 = tpu.matmul %55, %57, %cst_44 {dimension_numbers = #tpu.dot_dimension_numbers<[1], [0], [0], [1], [0, 0, 1, 1], [], []>} : vector<256x4xbf16>, vector<4x8xbf16>, vector<256x8xf32> -> vector<256x8xf32>
    %59 = arith.addf %49, %58 : vector<256x8xf32>
    %c1_45 = arith.constant 1 : index
    %c0_46 = arith.constant 0 : index
    %60 = arith.index_cast %52 : i32 to index
    %c0_47 = arith.constant 0 : index
    %61 = vector.load %arg2[%c1_45, %c0_46, %60, %c0_47] : memref<3x1x288x4xbf16, #tpu.memory_space<vmem>>, vector<1x1x256x4xbf16>
    %62 = vector.shape_cast %61 : vector<1x1x256x4xbf16> to vector<256x4xbf16>
    %c7 = arith.constant 7 : index
    %c0_48 = arith.constant 0 : index
    %c0_49 = arith.constant 0 : index
    %63 = vector.load %arg3[%c7, %c0_48, %c0_49] : memref<9x4x8xbf16, #tpu.memory_space<vmem>>, vector<1x4x8xbf16>
    %64 = vector.shape_cast %63 : vector<1x4x8xbf16> to vector<4x8xbf16>
    %cst_50 = arith.constant dense<0.000000e+00> : vector<256x8xf32>
    %65 = tpu.matmul %62, %64, %cst_50 {dimension_numbers = #tpu.dot_dimension_numbers<[1], [0], [0], [1], [0, 0, 1, 1], [], []>} : vector<256x4xbf16>, vector<4x8xbf16>, vector<256x8xf32> -> vector<256x8xf32>
    %66 = arith.addf %59, %65 : vector<256x8xf32>
    %c2_51 = arith.constant 2 : index
    %c0_52 = arith.constant 0 : index
    %67 = arith.index_cast %52 : i32 to index
    %c0_53 = arith.constant 0 : index
    %68 = vector.load %arg2[%c2_51, %c0_52, %67, %c0_53] : memref<3x1x288x4xbf16, #tpu.memory_space<vmem>>, vector<1x1x256x4xbf16>
    %69 = vector.shape_cast %68 : vector<1x1x256x4xbf16> to vector<256x4xbf16>
    %c8 = arith.constant 8 : index
    %c0_54 = arith.constant 0 : index
    %c0_55 = arith.constant 0 : index
    %70 = vector.load %arg3[%c8, %c0_54, %c0_55] : memref<9x4x8xbf16, #tpu.memory_space<vmem>>, vector<1x4x8xbf16>
    %71 = vector.shape_cast %70 : vector<1x4x8xbf16> to vector<4x8xbf16>
    %cst_56 = arith.constant dense<0.000000e+00> : vector<256x8xf32>
    %72 = tpu.matmul %69, %71, %cst_56 {dimension_numbers = #tpu.dot_dimension_numbers<[1], [0], [0], [1], [0, 0, 1, 1], [], []>} : vector<256x4xbf16>, vector<4x8xbf16>, vector<256x8xf32> -> vector<256x8xf32>
    %73 = arith.addf %66, %72 : vector<256x8xf32>
    %c0_57 = arith.constant 0 : index
    %c0_58 = arith.constant 0 : index
    %c0_59 = arith.constant 0 : index
    %74 = vector.load %arg4[%c0_57, %c0_58, %c0_59] : memref<1x256x8xf32, #tpu.memory_space<vmem>>, vector<1x256x8xf32>
    %75 = vector.shape_cast %74 : vector<1x256x8xf32> to vector<256x8xf32>
    %76 = vector.shape_cast %73 : vector<256x8xf32> to vector<1x256x8xf32>
    tpu.vector_store %arg4[%c0_57, %c0_58, %c0_59], %76 {strides = array<i32>} : memref<1x256x8xf32, #tpu.memory_space<vmem>>, vector<1x256x8xf32>,
    return
  }
  func.func @transform_0(%arg0: i32, %arg1: i32) -> (i32, i32, i32, i32) {
    %c0_i32 = arith.constant 0 : i32
    %c0_i32_0 = arith.constant 0 : i32
    %c0_i32_1 = arith.constant 0 : i32
    %c0_i32_2 = arith.constant 0 : i32
    return %c0_i32, %arg0, %c0_i32_0, %c0_i32_1 : i32, i32, i32, i32
  }
  func.func @transform_1(%arg0: i32, %arg1: i32) -> (i32, i32, i32) {
    %c0_i32 = arith.constant 0 : i32
    %c0_i32_0 = arith.constant 0 : i32
    %c0_i32_1 = arith.constant 0 : i32
    %c0_i32_2 = arith.constant 0 : i32
    return %c0_i32, %c0_i32_0, %c0_i32_1 : i32, i32, i32
  }
  func.func @transform_2(%arg0: i32, %arg1: i32) -> (i32, i32, i32) {
    %c0_i32 = arith.constant 0 : i32
    %c0_i32_0 = arith.constant 0 : i32
    return %arg0, %arg1, %c0_i32 : i32, i32, i32
  }
}

</mosaic_0001>

<llo_original>
// kernel: tpu_custom_call.1
$region0: #{tpu_custom_call.1}
  #allocation0 [shape = 'u32[]', space=smem, size = 0x4, offset = 0x4, fixed_abs, tag = 'smem constant byte address 0x4 - core index']
  #allocation1 [shape = 'u32[72,128]{1,0:T(1,128)}', space=vmem, size = 0x9000, scoped, tag = 'internal scratch']
  %s0 = inlined_call_operand.vmem [shape: bf16[3,2,288,4], index: 0, kind: input, shape index: {}]
  %s1 = inlined_call_operand.vmem [shape: bf16[9,4,8], index: 1, kind: input, shape index: {}]
  %s2 = inlined_call_operand.vmem [shape: f32[2,256,8], index: 2, kind: output, shape index: {}]
  %s3 = sld [smem:[#allocation0]]
  $region82: #{tpu_custom_call.1} parent=0
    _
  %s5 = ssub.s32 1, %s3
  %s6 = scalar_select 0, %s5, %s3
  $region1: #{tpu_custom_call.1} parent=0
    #allocation2 [shape = 'u8[442368]{0}', space=vmem, size = 0x6c000, scoped, tag = 'input window, operand 0']
    loop: start=0, step=1, limit=4
    $region2: #{tpu_custom_call.1} parent=1 // loop_pre_header
      _
    $region3: #{tpu_custom_call.1} parent=1 // loop_header
      %s8 = sphi 0, %s12
      %p9 = scmp.ge.s32.totalorder %s8, 4
      %s15 = sphi 0, %s27
      %s16 = sphi 0, %s23
      %s17 = sphi 0, %s15
      %s18 = sphi 0, %s16
      %s19 = sphi 0, %s17
      %s20 = sphi 0, %s18
      %s30 = sphi 0, %s32
      %s33 = sphi 0, %s30
      %s34 = sphi 0, %s33
      %s50 = sphi 0, %s34
      %s54 = sphi 0, %s54
      %s56 = sphi 0, %s54
      %s57 = sphi 0, %s56
      %s71 = sphi 0, %s57
      %s79 = sphi 0, %s81
      %s82 = sphi 0, %s79
      %s83 = sphi 0, %s82
      %s99 = sphi 0, %s83
    $region4: #{tpu_custom_call.1} parent=1 // loop_header_branch
      %11 = sbr.rel (%p9) target = $region8
    $region5: #{tpu_custom_call.1} parent=1 // loop_body
      %s13 = ssub.s32 %s8, 1
      %s14 = ssub.s32 %s8, 2
      %s21 = sadd.s32 1, %s16
      %p22 = scmp.ge.s32.totalorder %s21, 1
      %s23 = scalar_select %p22, 0, %s21
      %s24 = sadd.s32 1, %s15
      %s25 = scalar_select %p22, %s24, %s15
      %p26 = scmp.ge.s32.totalorder %s25, 2
      %s27 = scalar_select %p26, 0, %s25
      %s28 = ssub.s32 %s15, %s27
      %p29 = scmp.eq.s32.totalorder %s28, 0
      %s31 = sadd.s32 %s30, 1
      %s32 = scalar_select %p29, %s30, %s31
      %p35 = pneg %p29
      %p36 = scmp.eq.s32.totalorder %s8, 1
      %p37 = por %p35, %p36
      %p38 = scmp.ne.s32.totalorder %s30, %s33
      %p39 = scmp.eq.s32.totalorder %s8, 0
      %p40 = por %p38, %p39
      %p41 = scmp.ne.s32.totalorder %s30, %s33
      %p42 = scmp.eq.s32.totalorder %s13, 1
      %p43 = por %p41, %p42
      %p44 = scmp.ne.s32.totalorder %s33, %s34
      %p45 = scmp.eq.s32.totalorder %s13, 0
      %p46 = por %p44, %p45
      %p47 = scmp.ne.s32.totalorder %s33, %s34
      %p48 = scmp.eq.s32.totalorder %s14, 1
      %p49 = por %p47, %p48
      %p51 = scmp.ne.s32.totalorder %s34, %s50
      %p52 = scmp.eq.s32.totalorder %s14, 0
      %p53 = por %p51, %p52
      %s55 = sadd.s32 %s54, 1
      %p58 = scmp.eq.s32.totalorder %s8, 1
      %p59 = scmp.ne.s32.totalorder %s54, %s56
      %p60 = scmp.eq.s32.totalorder %s8, 0
      %p61 = por %p59, %p60
      %p62 = scmp.ne.s32.totalorder %s54, %s56
      %p63 = scmp.eq.s32.totalorder %s13, 1
      %p64 = por %p62, %p63
      %p65 = scmp.ne.s32.totalorder %s56, %s57
      %p66 = scmp.eq.s32.totalorder %s13, 0
      %p67 = por %p65, %p66
      %p68 = scmp.ne.s32.totalorder %s56, %s57
      %p69 = scmp.eq.s32.totalorder %s14, 1
      %p70 = por %p68, %p69
      %p72 = scmp.ne.s32.totalorder %s57, %s71
      %p73 = scmp.eq.s32.totalorder %s14, 0
      %p74 = por %p72, %p73
      %s75 = ssub.s32 %s15, %s27
      %s76 = ssub.s32 %s16, %s23
      %s77 = sor.u32 %s75, %s76
      %p78 = scmp.eq.s32.totalorder %s77, 0
      %s80 = sadd.s32 %s79, 1
      %s81 = scalar_select %p78, %s79, %s80
      %p84 = pneg %p78
      %p85 = scmp.eq.s32.totalorder %s8, 1
      %p86 = por %p84, %p85
      %p87 = scmp.ne.s32.totalorder %s79, %s82
      %p88 = scmp.eq.s32.totalorder %s8, 0
      %p89 = por %p87, %p88
      %p90 = scmp.ne.s32.totalorder %s79, %s82
      %p91 = scmp.eq.s32.totalorder %s13, 1
      %p92 = por %p90, %p91
      %p93 = scmp.ne.s32.totalorder %s82, %s83
      %p94 = scmp.eq.s32.totalorder %s13, 0
      %p95 = por %p93, %p94
      %p96 = scmp.ne.s32.totalorder %s82, %s83
      %p97 = scmp.eq.s32.totalorder %s14, 1
      %p98 = por %p96, %p97
      %p100 = scmp.ne.s32.totalorder %s83, %s99
      %p101 = scmp.eq.s32.totalorder %s14, 0
      %p102 = por %p100, %p101
      %p103 = scmp.le.s32.totalorder 1, %s8
      %p104 = scmp.lt.s32.totalorder %s8, 3
      %p105 = pnand %p103, %p104
      %p106 = pneg %p105
      // Predicated region
      $region9: #{tpu_custom_call.1} parent=5 // pred_check
        _
      $region10: #{tpu_custom_call.1} parent=5 // pred_check_branch
        %108 = sbr.rel (%p105) target = $region12
      $region11: #{tpu_custom_call.1} parent=5 // pred_region
        %s109 = ssub.s32 %s8, 1
        // Predicated region
        $region13: #{tpu_custom_call.1} parent=11 // pred_check
          %p110 = pneg %p67
        $region14: #{tpu_custom_call.1} parent=11 // pred_check_branch
          %112 = sbr.rel (%p110) target = $region16
        $region15: #{tpu_custom_call.1} parent=11 // pred_region
          _
        $region16: #{tpu_custom_call.1} parent=11 // pred_fallthru
          _
      $region12: #{tpu_custom_call.1} parent=5 // pred_fallthru
        _
      %p113 = scmp.lt.s32.totalorder %s8, 2
      // Predicated region
      $region17: #{tpu_custom_call.1} parent=5 // pred_check
        %p114 = pneg %p113
      $region18: #{tpu_custom_call.1} parent=5 // pred_check_branch
        %116 = sbr.rel (%p114) target = $region20
      $region19: #{tpu_custom_call.1} parent=5 // pred_region
        // Predicated region
        $region21: #{tpu_custom_call.1} parent=19 // pred_check
          %p117 = pneg %p40
        $region22: #{tpu_custom_call.1} parent=19 // pred_check_branch
          %119 = sbr.rel (%p117) target = $region24
        $region23: #{tpu_custom_call.1} parent=19 // pred_region
          %s120 = sand.u32 %s30, 1
          %s121 = sand.u32 %s30, 1
          %s122 = smul.addr %s121, 432
          %s123 = scalar_lea.vmem [#allocation2], %s122
          %s124 = smul.addr %s15, 36
          %s125 = smul.addr %s124, 4
          %s126 = scalar_lea.vmem %s0, %s125
          // Predicated region
          $region25: #{tpu_custom_call.1} parent=23 // pred_check
            _
          $region26: #{tpu_custom_call.1} parent=23 // pred_check_branch
            %128 = sbr.rel (0) target = $region28
          $region27: #{tpu_custom_call.1} parent=23 // pred_region
            // Predicated region
            $region29: #{tpu_custom_call.1} parent=27 // pred_check
              _
            $region30: #{tpu_custom_call.1} parent=27 // pred_check_branch
              %130 = sbr.rel target = $region32
            $region31: #{tpu_custom_call.1} parent=27 // pred_region
              // Predicated region
              $region44: #{tpu_custom_call.1} parent=31 // pred_check
                _
              $region45: #{tpu_custom_call.1} parent=31 // pred_check_branch
                %360 = sbr.rel (0) target = $region47
              $region46: #{tpu_custom_call.1} parent=31 // pred_region
                loop: start=0, step=1, limit=1
                $region48: #{tpu_custom_call.1} parent=46 // loop_pre_header
                  _
                $region49: #{tpu_custom_call.1} parent=46 // loop_header
                  %s362 = sphi 0, %s366
                  %p363 = scmp.ge.s32.totalorder %s362, 1
                  %s367 = sphi %s126, %s126
                  %s368 = sphi %s123, %s123
                $region50: #{tpu_custom_call.1} parent=46 // loop_header_branch
                  %365 = sbr.rel (%p363) target = $region54
                $region51: #{tpu_custom_call.1} parent=46 // loop_body
                  _
                $region52: #{tpu_custom_call.1} parent=46 // loop_footer
                  %s366 = sadd.s32 1, %s362
                $region53: #{tpu_custom_call.1} parent=46 // loop_footer_branch
                  %361 = sbr.rel target = $region49
                $region54: #{tpu_custom_call.1} parent=46 // loop_exit
                  _
                %s370 = ssub.s32 16, 1
                loop: start=0, step=1, limit=1
                $region55: #{tpu_custom_call.1} parent=46 // loop_pre_header
                  _
                $region56: #{tpu_custom_call.1} parent=46 // loop_header
                  %s372 = sphi 0, %s376
                  %p373 = scmp.ge.s32.totalorder %s372, 1
                  %s377 = sphi %s126, %s126
                  %s378 = sphi %s123, %s123
                $region57: #{tpu_custom_call.1} parent=46 // loop_header_branch
                  %375 = sbr.rel (%p373) target = $region61
                $region58: #{tpu_custom_call.1} parent=46 // loop_body
                  %v379 = vld [vmem:[%s377] sm:%s370]
                  %380 = vst [vmem:[%s378] sm:%s370] %v379
                  %v381 = vld [vmem:[%s377 + $0x4] sm:%s370]
                  %382 = vst [vmem:[%s378 + $0x4] sm:%s370] %v381
                  %v383 = vld [vmem:[%s377 + $0x8] sm:%s370]
                  %384 = vst [vmem:[%s378 + $0x8] sm:%s370] %v383
                  %v385 = vld [vmem:[%s377 + $0xc] sm:%s370]
                  %386 = vst [vmem:[%s378 + $0xc] sm:%s370] %v385
                  %v387 = vld [vmem:[%s377 + $0x10] sm:%s370]
                  %388 = vst [vmem:[%s378 + $0x10] sm:%s370] %v387
                  %v389 = vld [vmem:[%s377 + $0x14] sm:%s370]
                  %390 = vst [vmem:[%s378 + $0x14] sm:%s370] %v389
                  %v391 = vld [vmem:[%s377 + $0x18] sm:%s370]
                  %392 = vst [vmem:[%s378 + $0x18] sm:%s370] %v391
                  %v393 = vld [vmem:[%s377 + $0x1c] sm:%s370]
                  %394 = vst [vmem:[%s378 + $0x1c] sm:%s370] %v393
                  %v395 = vld [vmem:[%s377 + $0x20] sm:%s370]
                  %396 = vst [vmem:[%s378 + $0x20] sm:%s370] %v395
                  %v397 = vld [vmem:[%s377 + $0x24] sm:%s370]
                  %398 = vst [vmem:[%s378 + $0x24] sm:%s370] %v397
                  %v399 = vld [vmem:[%s377 + $0x28] sm:%s370]
                  %400 = vst [vmem:[%s378 + $0x28] sm:%s370] %v399
                  %v401 = vld [vmem:[%s377 + $0x2c] sm:%s370]
                  %402 = vst [vmem:[%s378 + $0x2c] sm:%s370] %v401
                  %v403 = vld [vmem:[%s377 + $0x30] sm:%s370]
                  %404 = vst [vmem:[%s378 + $0x30] sm:%s370] %v403
                  %v405 = vld [vmem:[%s377 + $0x34] sm:%s370]
                  %406 = vst [vmem:[%s378 + $0x34] sm:%s370] %v405
                  %v407 = vld [vmem:[%s377 + $0x38] sm:%s370]
                  %408 = vst [vmem:[%s378 + $0x38] sm:%s370] %v407
                  %v409 = vld [vmem:[%s377 + $0x3c] sm:%s370]
                  %410 = vst [vmem:[%s378 + $0x3c] sm:%s370] %v409
                  %v411 = vld [vmem:[%s377 + $0x40] sm:%s370]
                  %412 = vst [vmem:[%s378 + $0x40] sm:%s370] %v411
                  %v413 = vld [vmem:[%s377 + $0x44] sm:%s370]
                  %414 = vst [vmem:[%s378 + $0x44] sm:%s370] %v413
                  %v415 = vld [vmem:[%s377 + $0x48] sm:%s370]
                  %416 = vst [vmem:[%s378 + $0x48] sm:%s370] %v415
                  %v417 = vld [vmem:[%s377 + $0x4c] sm:%s370]
                  %418 = vst [vmem:[%s378 + $0x4c] sm:%s370] %v417
                  %v419 = vld [vmem:[%s377 + $0x50] sm:%s370]
                  %420 = vst [vmem:[%s378 + $0x50] sm:%s370] %v419
                  %v421 = vld [vmem:[%s377 + $0x54] sm:%s370]
                  %422 = vst [vmem:[%s378 + $0x54] sm:%s370] %v421
                  %v423 = vld [vmem:[%s377 + $0x58] sm:%s370]
                  %424 = vst [vmem:[%s378 + $0x58] sm:%s370] %v423
                  %v425 = vld [vmem:[%s377 + $0x5c] sm:%s370]
                  %426 = vst [vmem:[%s378 + $0x5c] sm:%s370] %v425
                  %v427 = vld [vmem:[%s377 + $0x60] sm:%s370]
                  %428 = vst [vmem:[%s378 + $0x60] sm:%s370] %v427
                  %v429 = vld [vmem:[%s377 + $0x64] sm:%s370]
                  %430 = vst [vmem:[%s378 + $0x64] sm:%s370] %v429
                  %v431 = vld [vmem:[%s377 + $0x68] sm:%s370]
                  %432 = vst [vmem:[%s378 + $0x68] sm:%s370] %v431
                  %v433 = vld [vmem:[%s377 + $0x6c] sm:%s370]
                  %434 = vst [vmem:[%s378 + $0x6c] sm:%s370] %v433
                  %v435 = vld [vmem:[%s377 + $0x70] sm:%s370]
                  %436 = vst [vmem:[%s378 + $0x70] sm:%s370] %v435
                  %v437 = vld [vmem:[%s377 + $0x74] sm:%s370]
                  %438 = vst [vmem:[%s378 + $0x74] sm:%s370] %v437
                  %v439 = vld [vmem:[%s377 + $0x78] sm:%s370]
                  %440 = vst [vmem:[%s378 + $0x78] sm:%s370] %v439
                  %v441 = vld [vmem:[%s377 + $0x7c] sm:%s370]
                  %442 = vst [vmem:[%s378 + $0x7c] sm:%s370] %v441
                  %v443 = vld [vmem:[%s377 + $0x80] sm:%s370]
                  %444 = vst [vmem:[%s378 + $0x80] sm:%s370] %v443
                  %v445 = vld [vmem:[%s377 + $0x84] sm:%s370]
                  %446 = vst [vmem:[%s378 + $0x84] sm:%s370] %v445
                  %v447 = vld [vmem:[%s377 + $0x88] sm:%s370]
                  %448 = vst [vmem:[%s378 + $0x88] sm:%s370] %v447
                  %v449 = vld [vmem:[%s377 + $0x8c] sm:%s370]
                  %450 = vst [vmem:[%s378 + $0x8c] sm:%s370] %v449
                  %v451 = vld [vmem:[%s377 + $0x120] sm:%s370]
                  %452 = vst [vmem:[%s378 + $0x90] sm:%s370] %v451
                  %v453 = vld [vmem:[%s377 + $0x124] sm:%s370]
                  %454 = vst [vmem:[%s378 + $0x94] sm:%s370] %v453
                  %v455 = vld [vmem:[%s377 + $0x128] sm:%s370]
                  %456 = vst [vmem:[%s378 + $0x98] sm:%s370] %v455
                  %v457 = vld [vmem:[%s377 + $0x12c] sm:%s370]
                  %458 = vst [vmem:[%s378 + $0x9c] sm:%s370] %v457
                  %v459 = vld [vmem:[%s377 + $0x130] sm:%s370]
                  %460 = vst [vmem:[%s378 + $0xa0] sm:%s370] %v459
                  %v461 = vld [vmem:[%s377 + $0x134] sm:%s370]
                  %462 = vst [vmem:[%s378 + $0xa4] sm:%s370] %v461
                  %v463 = vld [vmem:[%s377 + $0x138] sm:%s370]
                  %464 = vst [vmem:[%s378 + $0xa8] sm:%s370] %v463
                  %v465 = vld [vmem:[%s377 + $0x13c] sm:%s370]
                  %466 = vst [vmem:[%s378 + $0xac] sm:%s370] %v465
                  %v467 = vld [vmem:[%s377 + $0x140] sm:%s370]
                  %468 = vst [vmem:[%s378 + $0xb0] sm:%s370] %v467
                  %v469 = vld [vmem:[%s377 + $0x144] sm:%s370]
                  %470 = vst [vmem:[%s378 + $0xb4] sm:%s370] %v469
                  %v471 = vld [vmem:[%s377 + $0x148] sm:%s370]
                  %472 = vst [vmem:[%s378 + $0xb8] sm:%s370] %v471
                  %v473 = vld [vmem:[%s377 + $0x14c] sm:%s370]
                  %474 = vst [vmem:[%s378 + $0xbc] sm:%s370] %v473
                  %v475 = vld [vmem:[%s377 + $0x150] sm:%s370]
                  %476 = vst [vmem:[%s378 + $0xc0] sm:%s370] %v475
                  %v477 = vld [vmem:[%s377 + $0x154] sm:%s370]
                  %478 = vst [vmem:[%s378 + $0xc4] sm:%s370] %v477
                  %v479 = vld [vmem:[%s377 + $0x158] sm:%s370]
                  %480 = vst [vmem:[%s378 + $0xc8] sm:%s370] %v479
                  %v481 = vld [vmem:[%s377 + $0x15c] sm:%s370]
                  %482 = vst [vmem:[%s378 + $0xcc] sm:%s370] %v481
                  %v483 = vld [vmem:[%s377 + $0x160] sm:%s370]
                  %484 = vst [vmem:[%s378 + $0xd0] sm:%s370] %v483
                  %v485 = vld [vmem:[%s377 + $0x164] sm:%s370]
                  %486 = vst [vmem:[%s378 + $0xd4] sm:%s370] %v485
                  %v487 = vld [vmem:[%s377 + $0x168] sm:%s370]
                  %488 = vst [vmem:[%s378 + $0xd8] sm:%s370] %v487
                  %v489 = vld [vmem:[%s377 + $0x16c] sm:%s370]
                  %490 = vst [vmem:[%s378 + $0xdc] sm:%s370] %v489
                  %v491 = vld [vmem:[%s377 + $0x170] sm:%s370]
                  %492 = vst [vmem:[%s378 + $0xe0] sm:%s370] %v491
                  %v493 = vld [vmem:[%s377 + $0x174] sm:%s370]
                  %494 = vst [vmem:[%s378 + $0xe4] sm:%s370] %v493
                  %v495 = vld [vmem:[%s377 + $0x178] sm:%s370]
                  %496 = vst [vmem:[%s378 + $0xe8] sm:%s370] %v495
                  %v497 = vld [vmem:[%s377 + $0x17c] sm:%s370]
                  %498 = vst [vmem:[%s378 + $0xec] sm:%s370] %v497
                  %v499 = vld [vmem:[%s377 + $0x180] sm:%s370]
                  %500 = vst [vmem:[%s378 + $0xf0] sm:%s370] %v499
                  %v501 = vld [vmem:[%s377 + $0x184] sm:%s370]
                  %502 = vst [vmem:[%s378 + $0xf4] sm:%s370] %v501
                  %v503 = vld [vmem:[%s377 + $0x188] sm:%s370]
                  %504 = vst [vmem:[%s378 + $0xf8] sm:%s370] %v503
                  %v505 = vld [vmem:[%s377 + $0x18c] sm:%s370]
                  %506 = vst [vmem:[%s378 + $0xfc] sm:%s370] %v505
                  %v507 = vld [vmem:[%s377 + $0x190] sm:%s370]
                  %508 = vst [vmem:[%s378 + $0x100] sm:%s370] %v507
                  %v509 = vld [vmem:[%s377 + $0x194] sm:%s370]
                  %510 = vst [vmem:[%s378 + $0x104] sm:%s370] %v509
                  %v511 = vld [vmem:[%s377 + $0x198] sm:%s370]
                  %512 = vst [vmem:[%s378 + $0x108] sm:%s370] %v511
                  %v513 = vld [vmem:[%s377 + $0x19c] sm:%s370]
                  %514 = vst [vmem:[%s378 + $0x10c] sm:%s370] %v513
                  %v515 = vld [vmem:[%s377 + $0x1a0] sm:%s370]
                  %516 = vst [vmem:[%s378 + $0x110] sm:%s370] %v515
                  %v517 = vld [vmem:[%s377 + $0x1a4] sm:%s370]
                  %518 = vst [vmem:[%s378 + $0x114] sm:%s370] %v517
                  %v519 = vld [vmem:[%s377 + $0x1a8] sm:%s370]
                  %520 = vst [vmem:[%s378 + $0x118] sm:%s370] %v519
                  %v521 = vld [vmem:[%s377 + $0x1ac] sm:%s370]
                  %522 = vst [vmem:[%s378 + $0x11c] sm:%s370] %v521
                  %v523 = vld [vmem:[%s377 + $0x240] sm:%s370]
                  %524 = vst [vmem:[%s378 + $0x120] sm:%s370] %v523
                  %v525 = vld [vmem:[%s377 + $0x244] sm:%s370]
                  %526 = vst [vmem:[%s378 + $0x124] sm:%s370] %v525
                  %v527 = vld [vmem:[%s377 + $0x248] sm:%s370]
                  %528 = vst [vmem:[%s378 + $0x128] sm:%s370] %v527
                  %v529 = vld [vmem:[%s377 + $0x24c] sm:%s370]
                  %530 = vst [vmem:[%s378 + $0x12c] sm:%s370] %v529
                  %v531 = vld [vmem:[%s377 + $0x250] sm:%s370]
                  %532 = vst [vmem:[%s378 + $0x130] sm:%s370] %v531
                  %v533 = vld [vmem:[%s377 + $0x254] sm:%s370]
                  %534 = vst [vmem:[%s378 + $0x134] sm:%s370] %v533
                  %v535 = vld [vmem:[%s377 + $0x258] sm:%s370]
                  %536 = vst [vmem:[%s378 + $0x138] sm:%s370] %v535
                  %v537 = vld [vmem:[%s377 + $0x25c] sm:%s370]
                  %538 = vst [vmem:[%s378 + $0x13c] sm:%s370] %v537
                  %v539 = vld [vmem:[%s377 + $0x260] sm:%s370]
                  %540 = vst [vmem:[%s378 + $0x140] sm:%s370] %v539
                  %v541 = vld [vmem:[%s377 + $0x264] sm:%s370]
                  %542 = vst [vmem:[%s378 + $0x144] sm:%s370] %v541
                  %v543 = vld [vmem:[%s377 + $0x268] sm:%s370]
                  %544 = vst [vmem:[%s378 + $0x148] sm:%s370] %v543
                  %v545 = vld [vmem:[%s377 + $0x26c] sm:%s370]
                  %546 = vst [vmem:[%s378 + $0x14c] sm:%s370] %v545
                  %v547 = vld [vmem:[%s377 + $0x270] sm:%s370]
                  %548 = vst [vmem:[%s378 + $0x150] sm:%s370] %v547
                  %v549 = vld [vmem:[%s377 + $0x274] sm:%s370]
                  %550 = vst [vmem:[%s378 + $0x154] sm:%s370] %v549
                  %v551 = vld [vmem:[%s377 + $0x278] sm:%s370]
                  %552 = vst [vmem:[%s378 + $0x158] sm:%s370] %v551
                  %v553 = vld [vmem:[%s377 + $0x27c] sm:%s370]
                  %554 = vst [vmem:[%s378 + $0x15c] sm:%s370] %v553
                  %v555 = vld [vmem:[%s377 + $0x280] sm:%s370]
                  %556 = vst [vmem:[%s378 + $0x160] sm:%s370] %v555
                  %v557 = vld [vmem:[%s377 + $0x284] sm:%s370]
                  %558 = vst [vmem:[%s378 + $0x164] sm:%s370] %v557
                  %v559 = vld [vmem:[%s377 + $0x288] sm:%s370]
                  %560 = vst [vmem:[%s378 + $0x168] sm:%s370] %v559
                  %v561 = vld [vmem:[%s377 + $0x28c] sm:%s370]
                  %562 = vst [vmem:[%s378 + $0x16c] sm:%s370] %v561
                  %v563 = vld [vmem:[%s377 + $0x290] sm:%s370]
                  %564 = vst [vmem:[%s378 + $0x170] sm:%s370] %v563
                  %v565 = vld [vmem:[%s377 + $0x294] sm:%s370]
                  %566 = vst [vmem:[%s378 + $0x174] sm:%s370] %v565
                  %v567 = vld [vmem:[%s377 + $0x298] sm:%s370]
                  %568 = vst [vmem:[%s378 + $0x178] sm:%s370] %v567
                  %v569 = vld [vmem:[%s377 + $0x29c] sm:%s370]
                  %570 = vst [vmem:[%s378 + $0x17c] sm:%s370] %v569
                  %v571 = vld [vmem:[%s377 + $0x2a0] sm:%s370]
                  %572 = vst [vmem:[%s378 + $0x180] sm:%s370] %v571
                  %v573 = vld [vmem:[%s377 + $0x2a4] sm:%s370]
                  %574 = vst [vmem:[%s378 + $0x184] sm:%s370] %v573
                  %v575 = vld [vmem:[%s377 + $0x2a8] sm:%s370]
                  %576 = vst [vmem:[%s378 + $0x188] sm:%s370] %v575
                  %v577 = vld [vmem:[%s377 + $0x2ac] sm:%s370]
                  %578 = vst [vmem:[%s378 + $0x18c] sm:%s370] %v577
                  %v579 = vld [vmem:[%s377 + $0x2b0] sm:%s370]
                  %580 = vst [vmem:[%s378 + $0x190] sm:%s370] %v579
                  %v581 = vld [vmem:[%s377 + $0x2b4] sm:%s370]
                  %582 = vst [vmem:[%s378 + $0x194] sm:%s370] %v581
                  %v583 = vld [vmem:[%s377 + $0x2b8] sm:%s370]
                  %584 = vst [vmem:[%s378 + $0x198] sm:%s370] %v583
                  %v585 = vld [vmem:[%s377 + $0x2bc] sm:%s370]
                  %586 = vst [vmem:[%s378 + $0x19c] sm:%s370] %v585
                  %v587 = vld [vmem:[%s377 + $0x2c0] sm:%s370]
                  %588 = vst [vmem:[%s378 + $0x1a0] sm:%s370] %v587
                  %v589 = vld [vmem:[%s377 + $0x2c4] sm:%s370]
                  %590 = vst [vmem:[%s378 + $0x1a4] sm:%s370] %v589
                  %v591 = vld [vmem:[%s377 + $0x2c8] sm:%s370]
                  %592 = vst [vmem:[%s378 + $0x1a8] sm:%s370] %v591
                  %v593 = vld [vmem:[%s377 + $0x2cc] sm:%s370]
                  %594 = vst [vmem:[%s378 + $0x1ac] sm:%s370] %v593
                $region59: #{tpu_custom_call.1} parent=46 // loop_footer
                  %s376 = sadd.s32 1, %s372
                $region60: #{tpu_custom_call.1} parent=46 // loop_footer_branch
                  %371 = sbr.rel target = $region56
                $region61: #{tpu_custom_call.1} parent=46 // loop_exit
                  _
              $region47: #{tpu_custom_call.1} parent=31 // pred_fallthru
                _
            $region32: #{tpu_custom_call.1} parent=27 // pred_fallthru
              _
            // Predicated region
            $region33: #{tpu_custom_call.1} parent=27 // pred_check
              _
            $region34: #{tpu_custom_call.1} parent=27 // pred_check_branch
              %132 = sbr.rel (0) target = $region36
            $region35: #{tpu_custom_call.1} parent=27 // pred_region
              %s134 = ssub.s32 16, 1
              loop: start=0, step=1, limit=1
              $region37: #{tpu_custom_call.1} parent=35 // loop_pre_header
                _
              $region38: #{tpu_custom_call.1} parent=35 // loop_header
                %s136 = sphi 0, %s140
                %p137 = scmp.ge.s32.totalorder %s136, 1
                %s141 = sphi %s126, %s126
                %s142 = sphi %s123, %s123
              $region39: #{tpu_custom_call.1} parent=35 // loop_header_branch
                %139 = sbr.rel (%p137) target = $region43
              $region40: #{tpu_custom_call.1} parent=35 // loop_body
                %v143 = vld [vmem:[%s141] sm:%s134]
                %144 = vst [vmem:[%s142] sm:%s134] %v143
                %v145 = vld [vmem:[%s141 + $0x4] sm:%s134]
                %146 = vst [vmem:[%s142 + $0x4] sm:%s134] %v145
                %v147 = vld [vmem:[%s141 + $0x8] sm:%s134]
                %148 = vst [vmem:[%s142 + $0x8] sm:%s134] %v147
                %v149 = vld [vmem:[%s141 + $0xc] sm:%s134]
                %150 = vst [vmem:[%s142 + $0xc] sm:%s134] %v149
                %v151 = vld [vmem:[%s141 + $0x10] sm:%s134]
                %152 = vst [vmem:[%s142 + $0x10] sm:%s134] %v151
                %v153 = vld [vmem:[%s141 + $0x14] sm:%s134]
                %154 = vst [vmem:[%s142 + $0x14] sm:%s134] %v153
                %v155 = vld [vmem:[%s141 + $0x18] sm:%s134]
                %156 = vst [vmem:[%s142 + $0x18] sm:%s134] %v155
                %v157 = vld [vmem:[%s141 + $0x1c] sm:%s134]
                %158 = vst [vmem:[%s142 + $0x1c] sm:%s134] %v157
                %v159 = vld [vmem:[%s141 + $0x20] sm:%s134]
                %160 = vst [vmem:[%s142 + $0x20] sm:%s134] %v159
                %v161 = vld [vmem:[%s141 + $0x24] sm:%s134]
                %162 = vst [vmem:[%s142 + $0x24] sm:%s134] %v161
                %v163 = vld [vmem:[%s141 + $0x28] sm:%s134]
                %164 = vst [vmem:[%s142 + $0x28] sm:%s134] %v163
                %v165 = vld [vmem:[%s141 + $0x2c] sm:%s134]
                %166 = vst [vmem:[%s142 + $0x2c] sm:%s134] %v165
                %v167 = vld [vmem:[%s141 + $0x30] sm:%s134]
                %168 = vst [vmem:[%s142 + $0x30] sm:%s134] %v167
                %v169 = vld [vmem:[%s141 + $0x34] sm:%s134]
                %170 = vst [vmem:[%s142 + $0x34] sm:%s134] %v169
                %v171 = vld [vmem:[%s141 + $0x38] sm:%s134]
                %172 = vst [vmem:[%s142 + $0x38] sm:%s134] %v171
                %v173 = vld [vmem:[%s141 + $0x3c] sm:%s134]
                %174 = vst [vmem:[%s142 + $0x3c] sm:%s134] %v173
                %v175 = vld [vmem:[%s141 + $0x40] sm:%s134]
                %176 = vst [vmem:[%s142 + $0x40] sm:%s134] %v175
                %v177 = vld [vmem:[%s141 + $0x44] sm:%s134]
                %178 = vst [vmem:[%s142 + $0x44] sm:%s134] %v177
                %v179 = vld [vmem:[%s141 + $0x48] sm:%s134]
                %180 = vst [vmem:[%s142 + $0x48] sm:%s134] %v179
                %v181 = vld [vmem:[%s141 + $0x4c] sm:%s134]
                %182 = vst [vmem:[%s142 + $0x4c] sm:%s134] %v181
                %v183 = vld [vmem:[%s141 + $0x50] sm:%s134]
                %184 = vst [vmem:[%s142 + $0x50] sm:%s134] %v183
                %v185 = vld [vmem:[%s141 + $0x54] sm:%s134]
                %186 = vst [vmem:[%s142 + $0x54] sm:%s134] %v185
                %v187 = vld [vmem:[%s141 + $0x58] sm:%s134]
                %188 = vst [vmem:[%s142 + $0x58] sm:%s134] %v187
                %v189 = vld [vmem:[%s141 + $0x5c] sm:%s134]
                %190 = vst [vmem:[%s142 + $0x5c] sm:%s134] %v189
                %v191 = vld [vmem:[%s141 + $0x60] sm:%s134]
                %192 = vst [vmem:[%s142 + $0x60] sm:%s134] %v191
                %v193 = vld [vmem:[%s141 + $0x64] sm:%s134]
                %194 = vst [vmem:[%s142 + $0x64] sm:%s134] %v193
                %v195 = vld [vmem:[%s141 + $0x68] sm:%s134]
                %196 = vst [vmem:[%s142 + $0x68] sm:%s134] %v195
                %v197 = vld [vmem:[%s141 + $0x6c] sm:%s134]
                %198 = vst [vmem:[%s142 + $0x6c] sm:%s134] %v197
                %v199 = vld [vmem:[%s141 + $0x70] sm:%s134]
                %200 = vst [vmem:[%s142 + $0x70] sm:%s134] %v199
                %v201 = vld [vmem:[%s141 + $0x74] sm:%s134]
                %202 = vst [vmem:[%s142 + $0x74] sm:%s134] %v201
                %v203 = vld [vmem:[%s141 + $0x78] sm:%s134]
                %204 = vst [vmem:[%s142 + $0x78] sm:%s134] %v203
                %v205 = vld [vmem:[%s141 + $0x7c] sm:%s134]
                %206 = vst [vmem:[%s142 + $0x7c] sm:%s134] %v205
                %v207 = vld [vmem:[%s141 + $0x80] sm:%s134]
                %208 = vst [vmem:[%s142 + $0x80] sm:%s134] %v207
                %v209 = vld [vmem:[%s141 + $0x84] sm:%s134]
                %210 = vst [vmem:[%s142 + $0x84] sm:%s134] %v209
                %v211 = vld [vmem:[%s141 + $0x88] sm:%s134]
                %212 = vst [vmem:[%s142 + $0x88] sm:%s134] %v211
                %v213 = vld [vmem:[%s141 + $0x8c] sm:%s134]
                %214 = vst [vmem:[%s142 + $0x8c] sm:%s134] %v213
                %v215 = vld [vmem:[%s141 + $0x120] sm:%s134]
                %216 = vst [vmem:[%s142 + $0x90] sm:%s134] %v215
                %v217 = vld [vmem:[%s141 + $0x124] sm:%s134]
                %218 = vst [vmem:[%s142 + $0x94] sm:%s134] %v217
                %v219 = vld [vmem:[%s141 + $0x128] sm:%s134]
                %220 = vst [vmem:[%s142 + $0x98] sm:%s134] %v219
                %v221 = vld [vmem:[%s141 + $0x12c] sm:%s134]
                %222 = vst [vmem:[%s142 + $0x9c] sm:%s134] %v221
                %v223 = vld [vmem:[%s141 + $0x130] sm:%s134]
                %224 = vst [vmem:[%s142 + $0xa0] sm:%s134] %v223
                %v225 = vld [vmem:[%s141 + $0x134] sm:%s134]
                %226 = vst [vmem:[%s142 + $0xa4] sm:%s134] %v225
                %v227 = vld [vmem:[%s141 + $0x138] sm:%s134]
                %228 = vst [vmem:[%s142 + $0xa8] sm:%s134] %v227
                %v229 = vld [vmem:[%s141 + $0x13c] sm:%s134]
                %230 = vst [vmem:[%s142 + $0xac] sm:%s134] %v229
                %v231 = vld [vmem:[%s141 + $0x140] sm:%s134]
                %232 = vst [vmem:[%s142 + $0xb0] sm:%s134] %v231
                %v233 = vld [vmem:[%s141 + $0x144] sm:%s134]
                %234 = vst [vmem:[%s142 + $0xb4] sm:%s134] %v233
                %v235 = vld [vmem:[%s141 + $0x148] sm:%s134]
                %236 = vst [vmem:[%s142 + $0xb8] sm:%s134] %v235
                %v237 = vld [vmem:[%s141 + $0x14c] sm:%s134]
                %238 = vst [vmem:[%s142 + $0xbc] sm:%s134] %v237
                %v239 = vld [vmem:[%s141 + $0x150] sm:%s134]
                %240 = vst [vmem:[%s142 + $0xc0] sm:%s134] %v239
                %v241 = vld [vmem:[%s141 + $0x154] sm:%s134]
                %242 = vst [vmem:[%s142 + $0xc4] sm:%s134] %v241
                %v243 = vld [vmem:[%s141 + $0x158] sm:%s134]
                %244 = vst [vmem:[%s142 + $0xc8] sm:%s134] %v243
                %v245 = vld [vmem:[%s141 + $0x15c] sm:%s134]
                %246 = vst [vmem:[%s142 + $0xcc] sm:%s134] %v245
                %v247 = vld [vmem:[%s141 + $0x160] sm:%s134]
                %248 = vst [vmem:[%s142 + $0xd0] sm:%s134] %v247
                %v249 = vld [vmem:[%s141 + $0x164] sm:%s134]
                %250 = vst [vmem:[%s142 + $0xd4] sm:%s134] %v249
                %v251 = vld [vmem:[%s141 + $0x168] sm:%s134]
                %252 = vst [vmem:[%s142 + $0xd8] sm:%s134] %v251
                %v253 = vld [vmem:[%s141 + $0x16c] sm:%s134]
                %254 = vst [vmem:[%s142 + $0xdc] sm:%s134] %v253
                %v255 = vld [vmem:[%s141 + $0x170] sm:%s134]
                %256 = vst [vmem:[%s142 + $0xe0] sm:%s134] %v255
                %v257 = vld [vmem:[%s141 + $0x174] sm:%s134]
                %258 = vst [vmem:[%s142 + $0xe4] sm:%s134] %v257
                %v259 = vld [vmem:[%s141 + $0x178] sm:%s134]
                %260 = vst [vmem:[%s142 + $0xe8] sm:%s134] %v259
                %v261 = vld [vmem:[%s141 + $0x17c] sm:%s134]
                %262 = vst [vmem:[%s142 + $0xec] sm:%s134] %v261
                %v263 = vld [vmem:[%s141 + $0x180] sm:%s134]
                %264 = vst [vmem:[%s142 + $0xf0] sm:%s134] %v263
                %v265 = vld [vmem:[%s141 + $0x184] sm:%s134]
                %266 = vst [vmem:[%s142 + $0xf4] sm:%s134] %v265
                %v267 = vld [vmem:[%s141 + $0x188] sm:%s134]
                %268 = vst [vmem:[%s142 + $0xf8] sm:%s134] %v267
                %v269 = vld [vmem:[%s141 + $0x18c] sm:%s134]
                %270 = vst [vmem:[%s142 + $0xfc] sm:%s134] %v269
                %v271 = vld [vmem:[%s141 + $0x190] sm:%s134]
                %272 = vst [vmem:[%s142 + $0x100] sm:%s134] %v271
                %v273 = vld [vmem:[%s141 + $0x194] sm:%s134]
                %274 = vst [vmem:[%s142 + $0x104] sm:%s134] %v273
                %v275 = vld [vmem:[%s141 + $0x198] sm:%s134]
                %276 = vst [vmem:[%s142 + $0x108] sm:%s134] %v275
                %v277 = vld [vmem:[%s141 + $0x19c] sm:%s134]
                %278 = vst [vmem:[%s142 + $0x10c] sm:%s134] %v277
                %v279 = vld [vmem:[%s141 + $0x1a0] sm:%s134]
                %280 = vst [vmem:[%s142 + $0x110] sm:%s134] %v279
                %v281 = vld [vmem:[%s141 + $0x1a4] sm:%s134]
                %282 = vst [vmem:[%s142 + $0x114] sm:%s134] %v281
                %v283 = vld [vmem:[%s141 + $0x1a8] sm:%s134]
                %284 = vst [vmem:[%s142 + $0x118] sm:%s134] %v283
                %v285 = vld [vmem:[%s141 + $0x1ac] sm:%s134]
                %286 = vst [vmem:[%s142 + $0x11c] sm:%s134] %v285
                %v287 = vld [vmem:[%s141 + $0x240] sm:%s134]
                %288 = vst [vmem:[%s142 + $0x120] sm:%s134] %v287
                %v289 = vld [vmem:[%s141 + $0x244] sm:%s134]
                %290 = vst [vmem:[%s142 + $0x124] sm:%s134] %v289
                %v291 = vld [vmem:[%s141 + $0x248] sm:%s134]
                %292 = vst [vmem:[%s142 + $0x128] sm:%s134] %v291
                %v293 = vld [vmem:[%s141 + $0x24c] sm:%s134]
                %294 = vst [vmem:[%s142 + $0x12c] sm:%s134] %v293
                %v295 = vld [vmem:[%s141 + $0x250] sm:%s134]
                %296 = vst [vmem:[%s142 + $0x130] sm:%s134] %v295
                %v297 = vld [vmem:[%s141 + $0x254] sm:%s134]
                %298 = vst [vmem:[%s142 + $0x134] sm:%s134] %v297
                %v299 = vld [vmem:[%s141 + $0x258] sm:%s134]
                %300 = vst [vmem:[%s142 + $0x138] sm:%s134] %v299
                %v301 = vld [vmem:[%s141 + $0x25c] sm:%s134]
                %302 = vst [vmem:[%s142 + $0x13c] sm:%s134] %v301
                %v303 = vld [vmem:[%s141 + $0x260] sm:%s134]
                %304 = vst [vmem:[%s142 + $0x140] sm:%s134] %v303
                %v305 = vld [vmem:[%s141 + $0x264] sm:%s134]
                %306 = vst [vmem:[%s142 + $0x144] sm:%s134] %v305
                %v307 = vld [vmem:[%s141 + $0x268] sm:%s134]
                %308 = vst [vmem:[%s142 + $0x148] sm:%s134] %v307
                %v309 = vld [vmem:[%s141 + $0x26c] sm:%s134]
                %310 = vst [vmem:[%s142 + $0x14c] sm:%s134] %v309
                %v311 = vld [vmem:[%s141 + $0x270] sm:%s134]
                %312 = vst [vmem:[%s142 + $0x150] sm:%s134] %v311
                %v313 = vld [vmem:[%s141 + $0x274] sm:%s134]
                %314 = vst [vmem:[%s142 + $0x154] sm:%s134] %v313
                %v315 = vld [vmem:[%s141 + $0x278] sm:%s134]
                %316 = vst [vmem:[%s142 + $0x158] sm:%s134] %v315
                %v317 = vld [vmem:[%s141 + $0x27c] sm:%s134]
                %318 = vst [vmem:[%s142 + $0x15c] sm:%s134] %v317
                %v319 = vld [vmem:[%s141 + $0x280] sm:%s134]
                %320 = vst [vmem:[%s142 + $0x160] sm:%s134] %v319
                %v321 = vld [vmem:[%s141 + $0x284] sm:%s134]
                %322 = vst [vmem:[%s142 + $0x164] sm:%s134] %v321
                %v323 = vld [vmem:[%s141 + $0x288] sm:%s134]
                %324 = vst [vmem:[%s142 + $0x168] sm:%s134] %v323
                %v325 = vld [vmem:[%s141 + $0x28c] sm:%s134]
                %326 = vst [vmem:[%s142 + $0x16c] sm:%s134] %v325
                %v327 = vld [vmem:[%s141 + $0x290] sm:%s134]
                %328 = vst [vmem:[%s142 + $0x170] sm:%s134] %v327
                %v329 = vld [vmem:[%s141 + $0x294] sm:%s134]
                %330 = vst [vmem:[%s142 + $0x174] sm:%s134] %v329
                %v331 = vld [vmem:[%s141 + $0x298] sm:%s134]
                %332 = vst [vmem:[%s142 + $0x178] sm:%s134] %v331
                %v333 = vld [vmem:[%s141 + $0x29c] sm:%s134]
                %334 = vst [vmem:[%s142 + $0x17c] sm:%s134] %v333
                %v335 = vld [vmem:[%s141 + $0x2a0] sm:%s134]
                %336 = vst [vmem:[%s142 + $0x180] sm:%s134] %v335
                %v337 = vld [vmem:[%s141 + $0x2a4] sm:%s134]
                %338 = vst [vmem:[%s142 + $0x184] sm:%s134] %v337
                %v339 = vld [vmem:[%s141 + $0x2a8] sm:%s134]
                %340 = vst [vmem:[%s142 + $0x188] sm:%s134] %v339
                %v341 = vld [vmem:[%s141 + $0x2ac] sm:%s134]
                %342 = vst [vmem:[%s142 + $0x18c] sm:%s134] %v341
                %v343 = vld [vmem:[%s141 + $0x2b0] sm:%s134]
                %344 = vst [vmem:[%s142 + $0x190] sm:%s134] %v343
                %v345 = vld [vmem:[%s141 + $0x2b4] sm:%s134]
                %346 = vst [vmem:[%s142 + $0x194] sm:%s134] %v345
                %v347 = vld [vmem:[%s141 + $0x2b8] sm:%s134]
                %348 = vst [vmem:[%s142 + $0x198] sm:%s134] %v347
                %v349 = vld [vmem:[%s141 + $0x2bc] sm:%s134]
                %350 = vst [vmem:[%s142 + $0x19c] sm:%s134] %v349
                %v351 = vld [vmem:[%s141 + $0x2c0] sm:%s134]
                %352 = vst [vmem:[%s142 + $0x1a0] sm:%s134] %v351
                %v353 = vld [vmem:[%s141 + $0x2c4] sm:%s134]
                %354 = vst [vmem:[%s142 + $0x1a4] sm:%s134] %v353
                %v355 = vld [vmem:[%s141 + $0x2c8] sm:%s134]
                %356 = vst [vmem:[%s142 + $0x1a8] sm:%s134] %v355
                %v357 = vld [vmem:[%s141 + $0x2cc] sm:%s134]
                %358 = vst [vmem:[%s142 + $0x1ac] sm:%s134] %v357
              $region41: #{tpu_custom_call.1} parent=35 // loop_footer
                %s140 = sadd.s32 1, %s136
              $region42: #{tpu_custom_call.1} parent=35 // loop_footer_branch
                %135 = sbr.rel target = $region38
              $region43: #{tpu_custom_call.1} parent=35 // loop_exit
                _
            $region36: #{tpu_custom_call.1} parent=27 // pred_fallthru
              _
          $region28: #{tpu_custom_call.1} parent=23 // pred_fallthru
            _
          %595 = vnop
        $region24: #{tpu_custom_call.1} parent=19 // pred_fallthru
          _
      $region20: #{tpu_custom_call.1} parent=5 // pred_fallthru
        _
      %p596 = scmp.le.s32.totalorder 1, %s8
      %p597 = scmp.lt.s32.totalorder %s8, 3
      %p598 = pnand %p596, %p597
      %p599 = pneg %p598
      // Predicated region
      $region62: #{tpu_custom_call.1} parent=5 // pred_check
        _
      $region63: #{tpu_custom_call.1} parent=5 // pred_check_branch
        %601 = sbr.rel (%p598) target = $region65
      $region64: #{tpu_custom_call.1} parent=5 // pred_region
        %s602 = ssub.s32 %s8, 1
        %s603 = sand.u32 %s33, 1
        %s604 = sand.u32 %s33, 1
        %s605 = smul.addr %s604, 432
        %s606 = scalar_lea.vmem [#allocation2], %s605
        // Predicated region
        $region66: #{tpu_custom_call.1} parent=64 // pred_check
          %p607 = pneg %p46
        $region67: #{tpu_custom_call.1} parent=64 // pred_check_branch
          %609 = sbr.rel (%p607) target = $region69
        $region68: #{tpu_custom_call.1} parent=64 // pred_region
          _
        $region69: #{tpu_custom_call.1} parent=64 // pred_fallthru
          _
        %s610 = sand.u32 %s33, 1
        %s611 = sand.u32 %s33, 1
        %s612 = smul.addr %s611, 432
        %s613 = scalar_lea.vmem [#allocation2], %s612
        %p614 = pneg %p46
        %p615 = pneg %p43
        %p616 = pneg %p67
        %p617 = pneg %p64
        %p618 = pneg %p95
        %p619 = pneg %p92
        %s620 = smul.u32 32, %s18
        %p621 = scmp.lt.s32.totalorder %s17, 1
        %s622 = scalar_select %p621, %s17, 1
        %p623 = scmp.lt.s32.totalorder %s620, 31
        %s624 = scalar_select %p623, %s620, 31
        %s625 = smul.addr %s622, 32
        %s626 = sadd.s32 %s624, %s625
        %s627 = smul.addr %s626, 8
        %s628 = scalar_lea.vmem %s2, %s627
        %s629 = smul.u32 32, %s18
        %p630 = scmp.lt.s32.totalorder %s17, 1
        %s631 = scalar_select %p630, %s17, 1
        %p632 = scmp.lt.s32.totalorder %s629, 31
        %s633 = scalar_select %p632, %s629, 31
        %s634 = smul.addr %s631, 32
        %s635 = sadd.s32 %s633, %s634
        %s636 = smul.addr %s635, 8
        %s637 = scalar_lea.vmem %s2, %s636
        %s638 = smul.u32 32, %s18
        %s640 = smul.u32 %s18, 16
        %s641 = smul.u32 %s18, 256
        %s642 = sshra.s32 %s641, 3
        %s643 = sand.u32 %s641, 7
        %s644 = smul.addr %s642, 4
        %s645 = scalar_lea.vmem %s606, %s644 [#allocation2]
        %v646 = vld [vmem:[%s645] sm:$0xf]
        %v647 = vld [vmem:[%s645 + $0x4] sm:$0xf]
        %v648 = vld [vmem:[%s645 + $0x8] sm:$0xf]
        %v649 = vld [vmem:[%s645 + $0xc] sm:$0xf]
        %v650 = vld [vmem:[%s645 + $0x10] sm:$0xf]
        %v651 = vld [vmem:[%s645 + $0x14] sm:$0xf]
        %v652 = vld [vmem:[%s645 + $0x18] sm:$0xf]
        %v653 = vld [vmem:[%s645 + $0x1c] sm:$0xf]
        %v654 = vld [vmem:[%s645 + $0x20] sm:$0xf]
        %v655 = vld [vmem:[%s645 + $0x24] sm:$0xf]
        %v656 = vld [vmem:[%s645 + $0x28] sm:$0xf]
        %v657 = vld [vmem:[%s645 + $0x2c] sm:$0xf]
        %v658 = vld [vmem:[%s645 + $0x30] sm:$0xf]
        %v659 = vld [vmem:[%s645 + $0x34] sm:$0xf]
        %v660 = vld [vmem:[%s645 + $0x38] sm:$0xf]
        %v661 = vld [vmem:[%s645 + $0x3c] sm:$0xf]
        %v662 = vld [vmem:[%s645 + $0x40] sm:$0xf]
        %v663 = vld [vmem:[%s645 + $0x44] sm:$0xf]
        %v664 = vld [vmem:[%s645 + $0x48] sm:$0xf]
        %v665 = vld [vmem:[%s645 + $0x4c] sm:$0xf]
        %v666 = vld [vmem:[%s645 + $0x50] sm:$0xf]
        %v667 = vld [vmem:[%s645 + $0x54] sm:$0xf]
        %v668 = vld [vmem:[%s645 + $0x58] sm:$0xf]
        %v669 = vld [vmem:[%s645 + $0x5c] sm:$0xf]
        %v670 = vld [vmem:[%s645 + $0x60] sm:$0xf]
        %v671 = vld [vmem:[%s645 + $0x64] sm:$0xf]
        %v672 = vld [vmem:[%s645 + $0x68] sm:$0xf]
        %v673 = vld [vmem:[%s645 + $0x6c] sm:$0xf]
        %v674 = vld [vmem:[%s645 + $0x70] sm:$0xf]
        %v675 = vld [vmem:[%s645 + $0x74] sm:$0xf]
        %v676 = vld [vmem:[%s645 + $0x78] sm:$0xf]
        %v677 = vld [vmem:[%s645 + $0x7c] sm:$0xf]
        %v678 = vld [vmem:[%s1] sm:$0x3]
        %s679 = sadd.s32 %s642, 36
        %s680 = smul.addr %s679, 4
        %s681 = scalar_lea.vmem %s606, %s680 [#allocation2]
        %v682 = vld [vmem:[%s681] sm:$0xf]
        %v683 = vld [vmem:[%s681 + $0x4] sm:$0xf]
        %v684 = vld [vmem:[%s681 + $0x8] sm:$0xf]
        %v685 = vld [vmem:[%s681 + $0xc] sm:$0xf]
        %v686 = vld [vmem:[%s681 + $0x10] sm:$0xf]
        %v687 = vld [vmem:[%s681 + $0x14] sm:$0xf]
        %v688 = vld [vmem:[%s681 + $0x18] sm:$0xf]
        %v689 = vld [vmem:[%s681 + $0x1c] sm:$0xf]
        %v690 = vld [vmem:[%s681 + $0x20] sm:$0xf]
        %v691 = vld [vmem:[%s681 + $0x24] sm:$0xf]
        %v692 = vld [vmem:[%s681 + $0x28] sm:$0xf]
        %v693 = vld [vmem:[%s681 + $0x2c] sm:$0xf]
        %v694 = vld [vmem:[%s681 + $0x30] sm:$0xf]
        %v695 = vld [vmem:[%s681 + $0x34] sm:$0xf]
        %v696 = vld [vmem:[%s681 + $0x38] sm:$0xf]
        %v697 = vld [vmem:[%s681 + $0x3c] sm:$0xf]
        %v698 = vld [vmem:[%s681 + $0x40] sm:$0xf]
        %v699 = vld [vmem:[%s681 + $0x44] sm:$0xf]
        %v700 = vld [vmem:[%s681 + $0x48] sm:$0xf]
        %v701 = vld [vmem:[%s681 + $0x4c] sm:$0xf]
        %v702 = vld [vmem:[%s681 + $0x50] sm:$0xf]
        %v703 = vld [vmem:[%s681 + $0x54] sm:$0xf]
        %v704 = vld [vmem:[%s681 + $0x58] sm:$0xf]
        %v705 = vld [vmem:[%s681 + $0x5c] sm:$0xf]
        %v706 = vld [vmem:[%s681 + $0x60] sm:$0xf]
        %v707 = vld [vmem:[%s681 + $0x64] sm:$0xf]
        %v708 = vld [vmem:[%s681 + $0x68] sm:$0xf]
        %v709 = vld [vmem:[%s681 + $0x6c] sm:$0xf]
        %v710 = vld [vmem:[%s681 + $0x70] sm:$0xf]
        %v711 = vld [vmem:[%s681 + $0x74] sm:$0xf]
        %v712 = vld [vmem:[%s681 + $0x78] sm:$0xf]
        %v713 = vld [vmem:[%s681 + $0x7c] sm:$0xf]
        %s714 = scalar_lea.vmem %s1, 2
        %v715 = vld [vmem:[%s714] sm:$0x3]
        %v748 = vunpack.c.l.b16 %v682
        %v749 = vunpack.c.l.b16 %v683
        %v750 = vunpack.c.l.b16 %v684
        %v751 = vunpack.c.l.b16 %v685
        %v752 = vunpack.c.l.b16 %v686
        %v753 = vunpack.c.l.b16 %v687
        %v754 = vunpack.c.l.b16 %v688
        %v755 = vunpack.c.l.b16 %v689
        %v756 = vunpack.c.l.b16 %v690
        %v757 = vunpack.c.l.b16 %v691
        %v758 = vunpack.c.l.b16 %v692
        %v759 = vunpack.c.l.b16 %v693
        %v760 = vunpack.c.l.b16 %v694
        %v761 = vunpack.c.l.b16 %v695
        %v762 = vunpack.c.l.b16 %v696
        %v763 = vunpack.c.l.b16 %v697
        %v764 = vunpack.c.l.b16 %v698
        %v765 = vunpack.c.l.b16 %v699
        %v766 = vunpack.c.l.b16 %v700
        %v767 = vunpack.c.l.b16 %v701
        %v768 = vunpack.c.l.b16 %v702
        %v769 = vunpack.c.l.b16 %v703
        %v770 = vunpack.c.l.b16 %v704
        %v771 = vunpack.c.l.b16 %v705
        %v772 = vunpack.c.l.b16 %v706
        %v773 = vunpack.c.l.b16 %v707
        %v774 = vunpack.c.l.b16 %v708
        %v775 = vunpack.c.l.b16 %v709
        %v776 = vunpack.c.l.b16 %v710
        %v777 = vunpack.c.l.b16 %v711
        %v778 = vunpack.c.l.b16 %v712
        %v779 = vunpack.c.l.b16 %v713
        %v780 = vpack.c.b16 %v749, %v748
        %v781 = vpack.c.b16 %v751, %v750
        %v782 = vpack.c.b16 %v753, %v752
        %v783 = vpack.c.b16 %v755, %v754
        %v784 = vpack.c.b16 %v757, %v756
        %v785 = vpack.c.b16 %v759, %v758
        %v786 = vpack.c.b16 %v761, %v760
        %v787 = vpack.c.b16 %v763, %v762
        %v788 = vpack.c.b16 %v765, %v764
        %v789 = vpack.c.b16 %v767, %v766
        %v790 = vpack.c.b16 %v769, %v768
        %v791 = vpack.c.b16 %v771, %v770
        %v792 = vpack.c.b16 %v773, %v772
        %v793 = vpack.c.b16 %v775, %v774
        %v794 = vpack.c.b16 %v777, %v776
        %v795 = vpack.c.b16 %v779, %v778
        %vm796 = vcmask 31744
        %v798 = vsel %vm796, %v780, 0
        %v801 = vsel %vm796, %v781, 0
        %v804 = vsel %vm796, %v782, 0
        %v807 = vsel %vm796, %v783, 0
        %v810 = vsel %vm796, %v784, 0
        %v813 = vsel %vm796, %v785, 0
        %v816 = vsel %vm796, %v786, 0
        %v819 = vsel %vm796, %v787, 0
        %v822 = vsel %vm796, %v788, 0
        %v825 = vsel %vm796, %v789, 0
        %v828 = vsel %vm796, %v790, 0
        %v831 = vsel %vm796, %v791, 0
        %v834 = vsel %vm796, %v792, 0
        %v837 = vsel %vm796, %v793, 0
        %v840 = vsel %vm796, %v794, 0
        %v843 = vsel %vm796, %v795, 0
        %vm845 = vcmask 1041408
        %v847 = vsel %vm845, %v715, 0
        %849 = vmatpush.bf16.msra.mxu0 0
        %850 = vmatpush.bf16.msra.mxu0 0
        %851 = vmatpush.bf16.msra.mxu0 0
        %852 = vmatpush.bf16.msra.mxu0 0
        %853 = vmatpush.bf16.msra.mxu0 0
        %854 = vmatpush.bf16.msra.mxu0 0
        %855 = vmatpush.bf16.msra.mxu0 0
        %856 = vmatpush.bf16.msra.mxu0 %v847
        %857 = vmatmul.bf16.gmra.mxu0 %v798
        %v858 = vpop.f32.mrf.mxu0
        %v859 = vadd.f32 0.0, %v858
        %v860 = vpop.f32.mrf.mxu0
        %v861 = vadd.f32 0.0, %v860
        %862 = vmatmul.bf16.gmra.mxu0 %v801
        %v863 = vpop.f32.mrf.mxu0
        %v864 = vadd.f32 0.0, %v863
        %v865 = vpop.f32.mrf.mxu0
        %v866 = vadd.f32 0.0, %v865
        %867 = vmatmul.bf16.gmra.mxu0 %v804
        %v868 = vpop.f32.mrf.mxu0
        %v869 = vadd.f32 0.0, %v868
        %v870 = vpop.f32.mrf.mxu0
        %v871 = vadd.f32 0.0, %v870
        %872 = vmatmul.bf16.gmra.mxu0 %v807
        %v873 = vpop.f32.mrf.mxu0
        %v874 = vadd.f32 0.0, %v873
        %v875 = vpop.f32.mrf.mxu0
        %v876 = vadd.f32 0.0, %v875
        %877 = vmatmul.bf16.gmra.mxu0 %v810
        %v878 = vpop.f32.mrf.mxu0
        %v879 = vadd.f32 0.0, %v878
        %v880 = vpop.f32.mrf.mxu0
        %v881 = vadd.f32 0.0, %v880
        %882 = vmatmul.bf16.gmra.mxu0 %v813
        %v883 = vpop.f32.mrf.mxu0
        %v884 = vadd.f32 0.0, %v883
        %v885 = vpop.f32.mrf.mxu0
        %v886 = vadd.f32 0.0, %v885
        %887 = vmatmul.bf16.gmra.mxu0 %v816
        %v888 = vpop.f32.mrf.mxu0
        %v889 = vadd.f32 0.0, %v888
        %v890 = vpop.f32.mrf.mxu0
        %v891 = vadd.f32 0.0, %v890
        %892 = vmatmul.bf16.gmra.mxu0 %v819
        %v893 = vpop.f32.mrf.mxu0
        %v894 = vadd.f32 0.0, %v893
        %v895 = vpop.f32.mrf.mxu0
        %v896 = vadd.f32 0.0, %v895
        %897 = vmatmul.bf16.gmra.mxu0 %v822
        %v898 = vpop.f32.mrf.mxu0
        %v899 = vadd.f32 0.0, %v898
        %v900 = vpop.f32.mrf.mxu0
        %v901 = vadd.f32 0.0, %v900
        %902 = vmatmul.bf16.gmra.mxu0 %v825
        %v903 = vpop.f32.mrf.mxu0
        %v904 = vadd.f32 0.0, %v903
        %v905 = vpop.f32.mrf.mxu0
        %v906 = vadd.f32 0.0, %v905
        %907 = vmatmul.bf16.gmra.mxu0 %v828
        %v908 = vpop.f32.mrf.mxu0
        %v909 = vadd.f32 0.0, %v908
        %v910 = vpop.f32.mrf.mxu0
        %v911 = vadd.f32 0.0, %v910
        %912 = vmatmul.bf16.gmra.mxu0 %v831
        %v913 = vpop.f32.mrf.mxu0
        %v914 = vadd.f32 0.0, %v913
        %v915 = vpop.f32.mrf.mxu0
        %v916 = vadd.f32 0.0, %v915
        %917 = vmatmul.bf16.gmra.mxu0 %v834
        %v918 = vpop.f32.mrf.mxu0
        %v919 = vadd.f32 0.0, %v918
        %v920 = vpop.f32.mrf.mxu0
        %v921 = vadd.f32 0.0, %v920
        %922 = vmatmul.bf16.gmra.mxu0 %v837
        %v923 = vpop.f32.mrf.mxu0
        %v924 = vadd.f32 0.0, %v923
        %v925 = vpop.f32.mrf.mxu0
        %v926 = vadd.f32 0.0, %v925
        %927 = vmatmul.bf16.gmra.mxu0 %v840
        %v928 = vpop.f32.mrf.mxu0
        %v929 = vadd.f32 0.0, %v928
        %v930 = vpop.f32.mrf.mxu0
        %v931 = vadd.f32 0.0, %v930
        %932 = vmatmul.bf16.gmra.mxu0 %v843
        %v933 = vpop.f32.mrf.mxu0
        %v934 = vadd.f32 0.0, %v933
        %v935 = vpop.f32.mrf.mxu0
        %v936 = vadd.f32 0.0, %v935
        %937 = vdwg.mxu0
        %v970 = vunpack.c.l.b16 %v646
        %v971 = vunpack.c.l.b16 %v647
        %v972 = vunpack.c.l.b16 %v648
        %v973 = vunpack.c.l.b16 %v649
        %v974 = vunpack.c.l.b16 %v650
        %v975 = vunpack.c.l.b16 %v651
        %v976 = vunpack.c.l.b16 %v652
        %v977 = vunpack.c.l.b16 %v653
        %v978 = vunpack.c.l.b16 %v654
        %v979 = vunpack.c.l.b16 %v655
        %v980 = vunpack.c.l.b16 %v656
        %v981 = vunpack.c.l.b16 %v657
        %v982 = vunpack.c.l.b16 %v658
        %v983 = vunpack.c.l.b16 %v659
        %v984 = vunpack.c.l.b16 %v660
        %v985 = vunpack.c.l.b16 %v661
        %v986 = vunpack.c.l.b16 %v662
        %v987 = vunpack.c.l.b16 %v663
        %v988 = vunpack.c.l.b16 %v664
        %v989 = vunpack.c.l.b16 %v665
        %v990 = vunpack.c.l.b16 %v666
        %v991 = vunpack.c.l.b16 %v667
        %v992 = vunpack.c.l.b16 %v668
        %v993 = vunpack.c.l.b16 %v669
        %v994 = vunpack.c.l.b16 %v670
        %v995 = vunpack.c.l.b16 %v671
        %v996 = vunpack.c.l.b16 %v672
        %v997 = vunpack.c.l.b16 %v673
        %v998 = vunpack.c.l.b16 %v674
        %v999 = vunpack.c.l.b16 %v675
        %v1000 = vunpack.c.l.b16 %v676
        %v1001 = vunpack.c.l.b16 %v677
        %v1002 = vpack.c.b16 %v971, %v970
        %v1003 = vpack.c.b16 %v973, %v972
        %v1004 = vpack.c.b16 %v975, %v974
        %v1005 = vpack.c.b16 %v977, %v976
        %v1006 = vpack.c.b16 %v979, %v978
        %v1007 = vpack.c.b16 %v981, %v980
        %v1008 = vpack.c.b16 %v983, %v982
        %v1009 = vpack.c.b16 %v985, %v984
        %v1010 = vpack.c.b16 %v987, %v986
        %v1011 = vpack.c.b16 %v989, %v988
        %v1012 = vpack.c.b16 %v991, %v990
        %v1013 = vpack.c.b16 %v993, %v992
        %v1014 = vpack.c.b16 %v995, %v994
        %v1015 = vpack.c.b16 %v997, %v996
        %v1016 = vpack.c.b16 %v999, %v998
        %v1017 = vpack.c.b16 %v1001, %v1000
        %v1019 = vsel %vm796, %v1002, 0
        %v1022 = vsel %vm796, %v1003, 0
        %v1025 = vsel %vm796, %v1004, 0
        %v1028 = vsel %vm796, %v1005, 0
        %v1031 = vsel %vm796, %v1006, 0
        %v1034 = vsel %vm796, %v1007, 0
        %v1037 = vsel %vm796, %v1008, 0
        %v1040 = vsel %vm796, %v1009, 0
        %v1043 = vsel %vm796, %v1010, 0
        %v1046 = vsel %vm796, %v1011, 0
        %v1049 = vsel %vm796, %v1012, 0
        %v1052 = vsel %vm796, %v1013, 0
        %v1055 = vsel %vm796, %v1014, 0
        %v1058 = vsel %vm796, %v1015, 0
        %v1061 = vsel %vm796, %v1016, 0
        %v1064 = vsel %vm796, %v1017, 0
        %v1067 = vsel %vm845, %v678, 0
        %1069 = vmatpush.bf16.msra.mxu0 0
        %1070 = vmatpush.bf16.msra.mxu0 0
        %1071 = vmatpush.bf16.msra.mxu0 0
        %1072 = vmatpush.bf16.msra.mxu0 0
        %1073 = vmatpush.bf16.msra.mxu0 0
        %1074 = vmatpush.bf16.msra.mxu0 0
        %1075 = vmatpush.bf16.msra.mxu0 0
        %1076 = vmatpush.bf16.msra.mxu0 %v1067
        %1077 = vmatmul.bf16.gmra.mxu0 %v1019
        %v1078 = vpop.f32.mrf.mxu0
        %v1079 = vadd.f32 %v859, %v1078
        %v1080 = vpop.f32.mrf.mxu0
        %v1081 = vadd.f32 %v861, %v1080
        %1082 = vmatmul.bf16.gmra.mxu0 %v1022
        %v1083 = vpop.f32.mrf.mxu0
        %v1084 = vadd.f32 %v864, %v1083
        %v1085 = vpop.f32.mrf.mxu0
        %v1086 = vadd.f32 %v866, %v1085
        %1087 = vmatmul.bf16.gmra.mxu0 %v1025
        %v1088 = vpop.f32.mrf.mxu0
        %v1089 = vadd.f32 %v869, %v1088
        %v1090 = vpop.f32.mrf.mxu0
        %v1091 = vadd.f32 %v871, %v1090
        %1092 = vmatmul.bf16.gmra.mxu0 %v1028
        %v1093 = vpop.f32.mrf.mxu0
        %v1094 = vadd.f32 %v874, %v1093
        %v1095 = vpop.f32.mrf.mxu0
        %v1096 = vadd.f32 %v876, %v1095
        %1097 = vmatmul.bf16.gmra.mxu0 %v1031
        %v1098 = vpop.f32.mrf.mxu0
        %v1099 = vadd.f32 %v879, %v1098
        %v1100 = vpop.f32.mrf.mxu0
        %v1101 = vadd.f32 %v881, %v1100
        %1102 = vmatmul.bf16.gmra.mxu0 %v1034
        %v1103 = vpop.f32.mrf.mxu0
        %v1104 = vadd.f32 %v884, %v1103
        %v1105 = vpop.f32.mrf.mxu0
        %v1106 = vadd.f32 %v886, %v1105
        %1107 = vmatmul.bf16.gmra.mxu0 %v1037
        %v1108 = vpop.f32.mrf.mxu0
        %v1109 = vadd.f32 %v889, %v1108
        %v1110 = vpop.f32.mrf.mxu0
        %v1111 = vadd.f32 %v891, %v1110
        %1112 = vmatmul.bf16.gmra.mxu0 %v1040
        %v1113 = vpop.f32.mrf.mxu0
        %v1114 = vadd.f32 %v894, %v1113
        %v1115 = vpop.f32.mrf.mxu0
        %v1116 = vadd.f32 %v896, %v1115
        %1117 = vmatmul.bf16.gmra.mxu0 %v1043
        %v1118 = vpop.f32.mrf.mxu0
        %v1119 = vadd.f32 %v899, %v1118
        %v1120 = vpop.f32.mrf.mxu0
        %v1121 = vadd.f32 %v901, %v1120
        %1122 = vmatmul.bf16.gmra.mxu0 %v1046
        %v1123 = vpop.f32.mrf.mxu0
        %v1124 = vadd.f32 %v904, %v1123
        %v1125 = vpop.f32.mrf.mxu0
        %v1126 = vadd.f32 %v906, %v1125
        %1127 = vmatmul.bf16.gmra.mxu0 %v1049
        %v1128 = vpop.f32.mrf.mxu0
        %v1129 = vadd.f32 %v909, %v1128
        %v1130 = vpop.f32.mrf.mxu0
        %v1131 = vadd.f32 %v911, %v1130
        %1132 = vmatmul.bf16.gmra.mxu0 %v1052
        %v1133 = vpop.f32.mrf.mxu0
        %v1134 = vadd.f32 %v914, %v1133
        %v1135 = vpop.f32.mrf.mxu0
        %v1136 = vadd.f32 %v916, %v1135
        %1137 = vmatmul.bf16.gmra.mxu0 %v1055
        %v1138 = vpop.f32.mrf.mxu0
        %v1139 = vadd.f32 %v919, %v1138
        %v1140 = vpop.f32.mrf.mxu0
        %v1141 = vadd.f32 %v921, %v1140
        %1142 = vmatmul.bf16.gmra.mxu0 %v1058
        %v1143 = vpop.f32.mrf.mxu0
        %v1144 = vadd.f32 %v924, %v1143
        %v1145 = vpop.f32.mrf.mxu0
        %v1146 = vadd.f32 %v926, %v1145
        %1147 = vmatmul.bf16.gmra.mxu0 %v1061
        %v1148 = vpop.f32.mrf.mxu0
        %v1149 = vadd.f32 %v929, %v1148
        %v1150 = vpop.f32.mrf.mxu0
        %v1151 = vadd.f32 %v931, %v1150
        %1152 = vmatmul.bf16.gmra.mxu0 %v1064
        %v1153 = vpop.f32.mrf.mxu0
        %v1154 = vadd.f32 %v934, %v1153
        %v1155 = vpop.f32.mrf.mxu0
        %v1156 = vadd.f32 %v936, %v1155
        %1157 = vdwg.mxu0
        %s1158 = sadd.s32 %s642, 72
        %s1159 = smul.addr %s1158, 4
        %s1160 = scalar_lea.vmem %s606, %s1159 [#allocation2]
        %v1161 = vld [vmem:[%s1160] sm:$0xf]
        %v1162 = vld [vmem:[%s1160 + $0x4] sm:$0xf]
        %v1163 = vld [vmem:[%s1160 + $0x8] sm:$0xf]
        %v1164 = vld [vmem:[%s1160 + $0xc] sm:$0xf]
        %v1165 = vld [vmem:[%s1160 + $0x10] sm:$0xf]
        %v1166 = vld [vmem:[%s1160 + $0x14] sm:$0xf]
        %v1167 = vld [vmem:[%s1160 + $0x18] sm:$0xf]
        %v1168 = vld [vmem:[%s1160 + $0x1c] sm:$0xf]
        %v1169 = vld [vmem:[%s1160 + $0x20] sm:$0xf]
        %v1170 = vld [vmem:[%s1160 + $0x24] sm:$0xf]
        %v1171 = vld [vmem:[%s1160 + $0x28] sm:$0xf]
        %v1172 = vld [vmem:[%s1160 + $0x2c] sm:$0xf]
        %v1173 = vld [vmem:[%s1160 + $0x30] sm:$0xf]
        %v1174 = vld [vmem:[%s1160 + $0x34] sm:$0xf]
        %v1175 = vld [vmem:[%s1160 + $0x38] sm:$0xf]
        %v1176 = vld [vmem:[%s1160 + $0x3c] sm:$0xf]
        %v1177 = vld [vmem:[%s1160 + $0x40] sm:$0xf]
        %v1178 = vld [vmem:[%s1160 + $0x44] sm:$0xf]
        %v1179 = vld [vmem:[%s1160 + $0x48] sm:$0xf]
        %v1180 = vld [vmem:[%s1160 + $0x4c] sm:$0xf]
        %v1181 = vld [vmem:[%s1160 + $0x50] sm:$0xf]
        %v1182 = vld [vmem:[%s1160 + $0x54] sm:$0xf]
        %v1183 = vld [vmem:[%s1160 + $0x58] sm:$0xf]
        %v1184 = vld [vmem:[%s1160 + $0x5c] sm:$0xf]
        %v1185 = vld [vmem:[%s1160 + $0x60] sm:$0xf]
        %v1186 = vld [vmem:[%s1160 + $0x64] sm:$0xf]
        %v1187 = vld [vmem:[%s1160 + $0x68] sm:$0xf]
        %v1188 = vld [vmem:[%s1160 + $0x6c] sm:$0xf]
        %v1189 = vld [vmem:[%s1160 + $0x70] sm:$0xf]
        %v1190 = vld [vmem:[%s1160 + $0x74] sm:$0xf]
        %v1191 = vld [vmem:[%s1160 + $0x78] sm:$0xf]
        %v1192 = vld [vmem:[%s1160 + $0x7c] sm:$0xf]
        %s1193 = scalar_lea.vmem %s1, 4
        %v1194 = vld [vmem:[%s1193] sm:$0x3]
        %v1227 = vunpack.c.l.b16 %v1161
        %v1228 = vunpack.c.l.b16 %v1162
        %v1229 = vunpack.c.l.b16 %v1163
        %v1230 = vunpack.c.l.b16 %v1164
        %v1231 = vunpack.c.l.b16 %v1165
        %v1232 = vunpack.c.l.b16 %v1166
        %v1233 = vunpack.c.l.b16 %v1167
        %v1234 = vunpack.c.l.b16 %v1168
        %v1235 = vunpack.c.l.b16 %v1169
        %v1236 = vunpack.c.l.b16 %v1170
        %v1237 = vunpack.c.l.b16 %v1171
        %v1238 = vunpack.c.l.b16 %v1172
        %v1239 = vunpack.c.l.b16 %v1173
        %v1240 = vunpack.c.l.b16 %v1174
        %v1241 = vunpack.c.l.b16 %v1175
        %v1242 = vunpack.c.l.b16 %v1176
        %v1243 = vunpack.c.l.b16 %v1177
        %v1244 = vunpack.c.l.b16 %v1178
        %v1245 = vunpack.c.l.b16 %v1179
        %v1246 = vunpack.c.l.b16 %v1180
        %v1247 = vunpack.c.l.b16 %v1181
        %v1248 = vunpack.c.l.b16 %v1182
        %v1249 = vunpack.c.l.b16 %v1183
        %v1250 = vunpack.c.l.b16 %v1184
        %v1251 = vunpack.c.l.b16 %v1185
        %v1252 = vunpack.c.l.b16 %v1186
        %v1253 = vunpack.c.l.b16 %v1187
        %v1254 = vunpack.c.l.b16 %v1188
        %v1255 = vunpack.c.l.b16 %v1189
        %v1256 = vunpack.c.l.b16 %v1190
        %v1257 = vunpack.c.l.b16 %v1191
        %v1258 = vunpack.c.l.b16 %v1192
        %v1259 = vpack.c.b16 %v1228, %v1227
        %v1260 = vpack.c.b16 %v1230, %v1229
        %v1261 = vpack.c.b16 %v1232, %v1231
        %v1262 = vpack.c.b16 %v1234, %v1233
        %v1263 = vpack.c.b16 %v1236, %v1235
        %v1264 = vpack.c.b16 %v1238, %v1237
        %v1265 = vpack.c.b16 %v1240, %v1239
        %v1266 = vpack.c.b16 %v1242, %v1241
        %v1267 = vpack.c.b16 %v1244, %v1243
        %v1268 = vpack.c.b16 %v1246, %v1245
        %v1269 = vpack.c.b16 %v1248, %v1247
        %v1270 = vpack.c.b16 %v1250, %v1249
        %v1271 = vpack.c.b16 %v1252, %v1251
        %v1272 = vpack.c.b16 %v1254, %v1253
        %v1273 = vpack.c.b16 %v1256, %v1255
        %v1274 = vpack.c.b16 %v1258, %v1257
        %v1276 = vsel %vm796, %v1259, 0
        %v1279 = vsel %vm796, %v1260, 0
        %v1282 = vsel %vm796, %v1261, 0
        %v1285 = vsel %vm796, %v1262, 0
        %v1288 = vsel %vm796, %v1263, 0
        %v1291 = vsel %vm796, %v1264, 0
        %v1294 = vsel %vm796, %v1265, 0
        %v1297 = vsel %vm796, %v1266, 0
        %v1300 = vsel %vm796, %v1267, 0
        %v1303 = vsel %vm796, %v1268, 0
        %v1306 = vsel %vm796, %v1269, 0
        %v1309 = vsel %vm796, %v1270, 0
        %v1312 = vsel %vm796, %v1271, 0
        %v1315 = vsel %vm796, %v1272, 0
        %v1318 = vsel %vm796, %v1273, 0
        %v1321 = vsel %vm796, %v1274, 0
        %v1324 = vsel %vm845, %v1194, 0
        %1326 = vmatpush.bf16.msra.mxu0 0
        %1327 = vmatpush.bf16.msra.mxu0 0
        %1328 = vmatpush.bf16.msra.mxu0 0
        %1329 = vmatpush.bf16.msra.mxu0 0
        %1330 = vmatpush.bf16.msra.mxu0 0
        %1331 = vmatpush.bf16.msra.mxu0 0
        %1332 = vmatpush.bf16.msra.mxu0 0
        %1333 = vmatpush.bf16.msra.mxu0 %v1324
        %1334 = vmatmul.bf16.gmra.mxu0 %v1276
        %v1335 = vpop.f32.mrf.mxu0
        %v1336 = vadd.f32 0.0, %v1335
        %v1337 = vpop.f32.mrf.mxu0
        %v1338 = vadd.f32 0.0, %v1337
        %1339 = vmatmul.bf16.gmra.mxu0 %v1279
        %v1340 = vpop.f32.mrf.mxu0
        %v1341 = vadd.f32 0.0, %v1340
        %v1342 = vpop.f32.mrf.mxu0
        %v1343 = vadd.f32 0.0, %v1342
        %1344 = vmatmul.bf16.gmra.mxu0 %v1282
        %v1345 = vpop.f32.mrf.mxu0
        %v1346 = vadd.f32 0.0, %v1345
        %v1347 = vpop.f32.mrf.mxu0
        %v1348 = vadd.f32 0.0, %v1347
        %1349 = vmatmul.bf16.gmra.mxu0 %v1285
        %v1350 = vpop.f32.mrf.mxu0
        %v1351 = vadd.f32 0.0, %v1350
        %v1352 = vpop.f32.mrf.mxu0
        %v1353 = vadd.f32 0.0, %v1352
        %1354 = vmatmul.bf16.gmra.mxu0 %v1288
        %v1355 = vpop.f32.mrf.mxu0
        %v1356 = vadd.f32 0.0, %v1355
        %v1357 = vpop.f32.mrf.mxu0
        %v1358 = vadd.f32 0.0, %v1357
        %1359 = vmatmul.bf16.gmra.mxu0 %v1291
        %v1360 = vpop.f32.mrf.mxu0
        %v1361 = vadd.f32 0.0, %v1360
        %v1362 = vpop.f32.mrf.mxu0
        %v1363 = vadd.f32 0.0, %v1362
        %1364 = vmatmul.bf16.gmra.mxu0 %v1294
        %v1365 = vpop.f32.mrf.mxu0
        %v1366 = vadd.f32 0.0, %v1365
        %v1367 = vpop.f32.mrf.mxu0
        %v1368 = vadd.f32 0.0, %v1367
        %1369 = vmatmul.bf16.gmra.mxu0 %v1297
        %v1370 = vpop.f32.mrf.mxu0
        %v1371 = vadd.f32 0.0, %v1370
        %v1372 = vpop.f32.mrf.mxu0
        %v1373 = vadd.f32 0.0, %v1372
        %1374 = vmatmul.bf16.gmra.mxu0 %v1300
        %v1375 = vpop.f32.mrf.mxu0
        %v1376 = vadd.f32 0.0, %v1375
        %v1377 = vpop.f32.mrf.mxu0
        %v1378 = vadd.f32 0.0, %v1377
        %1379 = vmatmul.bf16.gmra.mxu0 %v1303
        %v1380 = vpop.f32.mrf.mxu0
        %v1381 = vadd.f32 0.0, %v1380
        %v1382 = vpop.f32.mrf.mxu0
        %v1383 = vadd.f32 0.0, %v1382
        %1384 = vmatmul.bf16.gmra.mxu0 %v1306
        %v1385 = vpop.f32.mrf.mxu0
        %v1386 = vadd.f32 0.0, %v1385
        %v1387 = vpop.f32.mrf.mxu0
        %v1388 = vadd.f32 0.0, %v1387
        %1389 = vmatmul.bf16.gmra.mxu0 %v1309
        %v1390 = vpop.f32.mrf.mxu0
        %v1391 = vadd.f32 0.0, %v1390
        %v1392 = vpop.f32.mrf.mxu0
        %v1393 = vadd.f32 0.0, %v1392
        %1394 = vmatmul.bf16.gmra.mxu0 %v1312
        %v1395 = vpop.f32.mrf.mxu0
        %v1396 = vadd.f32 0.0, %v1395
        %v1397 = vpop.f32.mrf.mxu0
        %v1398 = vadd.f32 0.0, %v1397
        %1399 = vmatmul.bf16.gmra.mxu0 %v1315
        %v1400 = vpop.f32.mrf.mxu0
        %v1401 = vadd.f32 0.0, %v1400
        %v1402 = vpop.f32.mrf.mxu0
        %v1403 = vadd.f32 0.0, %v1402
        %1404 = vmatmul.bf16.gmra.mxu0 %v1318
        %v1405 = vpop.f32.mrf.mxu0
        %v1406 = vadd.f32 0.0, %v1405
        %v1407 = vpop.f32.mrf.mxu0
        %v1408 = vadd.f32 0.0, %v1407
        %1409 = vmatmul.bf16.gmra.mxu0 %v1321
        %v1410 = vpop.f32.mrf.mxu0
        %v1411 = vadd.f32 0.0, %v1410
        %v1412 = vpop.f32.mrf.mxu0
        %v1413 = vadd.f32 0.0, %v1412
        %1414 = vdwg.mxu0
        %v1415 = vadd.f32 %v1079, %v1336
        %v1416 = vadd.f32 %v1081, %v1338
        %v1417 = vadd.f32 %v1084, %v1341
        %v1418 = vadd.f32 %v1086, %v1343
        %v1419 = vadd.f32 %v1089, %v1346
        %v1420 = vadd.f32 %v1091, %v1348
        %v1421 = vadd.f32 %v1094, %v1351
        %v1422 = vadd.f32 %v1096, %v1353
        %v1423 = vadd.f32 %v1099, %v1356
        %v1424 = vadd.f32 %v1101, %v1358
        %v1425 = vadd.f32 %v1104, %v1361
        %v1426 = vadd.f32 %v1106, %v1363
        %v1427 = vadd.f32 %v1109, %v1366
        %v1428 = vadd.f32 %v1111, %v1368
        %v1429 = vadd.f32 %v1114, %v1371
        %v1430 = vadd.f32 %v1116, %v1373
        %v1431 = vadd.f32 %v1119, %v1376
        %v1432 = vadd.f32 %v1121, %v1378
        %v1433 = vadd.f32 %v1124, %v1381
        %v1434 = vadd.f32 %v1126, %v1383
        %v1435 = vadd.f32 %v1129, %v1386
        %v1436 = vadd.f32 %v1131, %v1388
        %v1437 = vadd.f32 %v1134, %v1391
        %v1438 = vadd.f32 %v1136, %v1393
        %v1439 = vadd.f32 %v1139, %v1396
        %v1440 = vadd.f32 %v1141, %v1398
        %v1441 = vadd.f32 %v1144, %v1401
        %v1442 = vadd.f32 %v1146, %v1403
        %v1443 = vadd.f32 %v1149, %v1406
        %v1444 = vadd.f32 %v1151, %v1408
        %v1445 = vadd.f32 %v1154, %v1411
        %v1446 = vadd.f32 %v1156, %v1413
        %s1447 = sadd.s32 %s640, 1
        %s1448 = smul.u32 %s1447, 16
        %s1449 = sshra.s32 %s1448, 3
        %s1450 = sand.u32 %s1448, 7
        %s1451 = smul.addr %s1449, 4
        %s1452 = scalar_lea.vmem %s606, %s1451 [#allocation2]
        %v1453 = vld [vmem:[%s1452] sm:$0xf]
        %v1454 = vld [vmem:[%s1452 + $0x4] sm:$0xf]
        %v1455 = vld [vmem:[%s1452 + $0x8] sm:$0xf]
        %v1456 = vld [vmem:[%s1452 + $0xc] sm:$0xf]
        %v1457 = vld [vmem:[%s1452 + $0x10] sm:$0xf]
        %v1458 = vld [vmem:[%s1452 + $0x14] sm:$0xf]
        %v1459 = vld [vmem:[%s1452 + $0x18] sm:$0xf]
        %v1460 = vld [vmem:[%s1452 + $0x1c] sm:$0xf]
        %v1461 = vld [vmem:[%s1452 + $0x20] sm:$0xf]
        %v1462 = vld [vmem:[%s1452 + $0x24] sm:$0xf]
        %v1463 = vld [vmem:[%s1452 + $0x28] sm:$0xf]
        %v1464 = vld [vmem:[%s1452 + $0x2c] sm:$0xf]
        %v1465 = vld [vmem:[%s1452 + $0x30] sm:$0xf]
        %v1466 = vld [vmem:[%s1452 + $0x34] sm:$0xf]
        %v1467 = vld [vmem:[%s1452 + $0x38] sm:$0xf]
        %v1468 = vld [vmem:[%s1452 + $0x3c] sm:$0xf]
        %v1469 = vld [vmem:[%s1452 + $0x40] sm:$0xf]
        %v1470 = vld [vmem:[%s1452 + $0x44] sm:$0xf]
        %v1471 = vld [vmem:[%s1452 + $0x48] sm:$0xf]
        %v1472 = vld [vmem:[%s1452 + $0x4c] sm:$0xf]
        %v1473 = vld [vmem:[%s1452 + $0x50] sm:$0xf]
        %v1474 = vld [vmem:[%s1452 + $0x54] sm:$0xf]
        %v1475 = vld [vmem:[%s1452 + $0x58] sm:$0xf]
        %v1476 = vld [vmem:[%s1452 + $0x5c] sm:$0xf]
        %v1477 = vld [vmem:[%s1452 + $0x60] sm:$0xf]
        %v1478 = vld [vmem:[%s1452 + $0x64] sm:$0xf]
        %v1479 = vld [vmem:[%s1452 + $0x68] sm:$0xf]
        %v1480 = vld [vmem:[%s1452 + $0x6c] sm:$0xf]
        %v1481 = vld [vmem:[%s1452 + $0x70] sm:$0xf]
        %v1482 = vld [vmem:[%s1452 + $0x74] sm:$0xf]
        %v1483 = vld [vmem:[%s1452 + $0x78] sm:$0xf]
        %v1484 = vld [vmem:[%s1452 + $0x7c] sm:$0xf]
        %s1485 = scalar_lea.vmem %s1, 6
        %v1486 = vld [vmem:[%s1485] sm:$0x3]
        %v1519 = vunpack.c.l.b16 %v1453
        %v1520 = vunpack.c.l.b16 %v1454
        %v1521 = vunpack.c.l.b16 %v1455
        %v1522 = vunpack.c.l.b16 %v1456
        %v1523 = vunpack.c.l.b16 %v1457
        %v1524 = vunpack.c.l.b16 %v1458
        %v1525 = vunpack.c.l.b16 %v1459
        %v1526 = vunpack.c.l.b16 %v1460
        %v1527 = vunpack.c.l.b16 %v1461
        %v1528 = vunpack.c.l.b16 %v1462
        %v1529 = vunpack.c.l.b16 %v1463
        %v1530 = vunpack.c.l.b16 %v1464
        %v1531 = vunpack.c.l.b16 %v1465
        %v1532 = vunpack.c.l.b16 %v1466
        %v1533 = vunpack.c.l.b16 %v1467
        %v1534 = vunpack.c.l.b16 %v1468
        %v1535 = vunpack.c.l.b16 %v1469
        %v1536 = vunpack.c.l.b16 %v1470
        %v1537 = vunpack.c.l.b16 %v1471
        %v1538 = vunpack.c.l.b16 %v1472
        %v1539 = vunpack.c.l.b16 %v1473
        %v1540 = vunpack.c.l.b16 %v1474
        %v1541 = vunpack.c.l.b16 %v1475
        %v1542 = vunpack.c.l.b16 %v1476
        %v1543 = vunpack.c.l.b16 %v1477
        %v1544 = vunpack.c.l.b16 %v1478
        %v1545 = vunpack.c.l.b16 %v1479
        %v1546 = vunpack.c.l.b16 %v1480
        %v1547 = vunpack.c.l.b16 %v1481
        %v1548 = vunpack.c.l.b16 %v1482
        %v1549 = vunpack.c.l.b16 %v1483
        %v1550 = vunpack.c.l.b16 %v1484
        %v1551 = vpack.c.b16 %v1520, %v1519
        %v1552 = vpack.c.b16 %v1522, %v1521
        %v1553 = vpack.c.b16 %v1524, %v1523
        %v1554 = vpack.c.b16 %v1526, %v1525
        %v1555 = vpack.c.b16 %v1528, %v1527
        %v1556 = vpack.c.b16 %v1530, %v1529
        %v1557 = vpack.c.b16 %v1532, %v1531
        %v1558 = vpack.c.b16 %v1534, %v1533
        %v1559 = vpack.c.b16 %v1536, %v1535
        %v1560 = vpack.c.b16 %v1538, %v1537
        %v1561 = vpack.c.b16 %v1540, %v1539
        %v1562 = vpack.c.b16 %v1542, %v1541
        %v1563 = vpack.c.b16 %v1544, %v1543
        %v1564 = vpack.c.b16 %v1546, %v1545
        %v1565 = vpack.c.b16 %v1548, %v1547
        %v1566 = vpack.c.b16 %v1550, %v1549
        %v1568 = vsel %vm796, %v1551, 0
        %v1571 = vsel %vm796, %v1552, 0
        %v1574 = vsel %vm796, %v1553, 0
        %v1577 = vsel %vm796, %v1554, 0
        %v1580 = vsel %vm796, %v1555, 0
        %v1583 = vsel %vm796, %v1556, 0
        %v1586 = vsel %vm796, %v1557, 0
        %v1589 = vsel %vm796, %v1558, 0
        %v1592 = vsel %vm796, %v1559, 0
        %v1595 = vsel %vm796, %v1560, 0
        %v1598 = vsel %vm796, %v1561, 0
        %v1601 = vsel %vm796, %v1562, 0
        %v1604 = vsel %vm796, %v1563, 0
        %v1607 = vsel %vm796, %v1564, 0
        %v1610 = vsel %vm796, %v1565, 0
        %v1613 = vsel %vm796, %v1566, 0
        %v1616 = vsel %vm845, %v1486, 0
        %1618 = vmatpush.bf16.msra.mxu0 0
        %1619 = vmatpush.bf16.msra.mxu0 0
        %1620 = vmatpush.bf16.msra.mxu0 0
        %1621 = vmatpush.bf16.msra.mxu0 0
        %1622 = vmatpush.bf16.msra.mxu0 0
        %1623 = vmatpush.bf16.msra.mxu0 0
        %1624 = vmatpush.bf16.msra.mxu0 0
        %1625 = vmatpush.bf16.msra.mxu0 %v1616
        %1626 = vmatmul.bf16.gmra.mxu0 %v1568
        %v1627 = vpop.f32.mrf.mxu0
        %v1628 = vadd.f32 0.0, %v1627
        %v1629 = vpop.f32.mrf.mxu0
        %v1630 = vadd.f32 0.0, %v1629
        %1631 = vmatmul.bf16.gmra.mxu0 %v1571
        %v1632 = vpop.f32.mrf.mxu0
        %v1633 = vadd.f32 0.0, %v1632
        %v1634 = vpop.f32.mrf.mxu0
        %v1635 = vadd.f32 0.0, %v1634
        %1636 = vmatmul.bf16.gmra.mxu0 %v1574
        %v1637 = vpop.f32.mrf.mxu0
        %v1638 = vadd.f32 0.0, %v1637
        %v1639 = vpop.f32.mrf.mxu0
        %v1640 = vadd.f32 0.0, %v1639
        %1641 = vmatmul.bf16.gmra.mxu0 %v1577
        %v1642 = vpop.f32.mrf.mxu0
        %v1643 = vadd.f32 0.0, %v1642
        %v1644 = vpop.f32.mrf.mxu0
        %v1645 = vadd.f32 0.0, %v1644
        %1646 = vmatmul.bf16.gmra.mxu0 %v1580
        %v1647 = vpop.f32.mrf.mxu0
        %v1648 = vadd.f32 0.0, %v1647
        %v1649 = vpop.f32.mrf.mxu0
        %v1650 = vadd.f32 0.0, %v1649
        %1651 = vmatmul.bf16.gmra.mxu0 %v1583
        %v1652 = vpop.f32.mrf.mxu0
        %v1653 = vadd.f32 0.0, %v1652
        %v1654 = vpop.f32.mrf.mxu0
        %v1655 = vadd.f32 0.0, %v1654
        %1656 = vmatmul.bf16.gmra.mxu0 %v1586
        %v1657 = vpop.f32.mrf.mxu0
        %v1658 = vadd.f32 0.0, %v1657
        %v1659 = vpop.f32.mrf.mxu0
        %v1660 = vadd.f32 0.0, %v1659
        %1661 = vmatmul.bf16.gmra.mxu0 %v1589
        %v1662 = vpop.f32.mrf.mxu0
        %v1663 = vadd.f32 0.0, %v1662
        %v1664 = vpop.f32.mrf.mxu0
        %v1665 = vadd.f32 0.0, %v1664
        %1666 = vmatmul.bf16.gmra.mxu0 %v1592
        %v1667 = vpop.f32.mrf.mxu0
        %v1668 = vadd.f32 0.0, %v1667
        %v1669 = vpop.f32.mrf.mxu0
        %v1670 = vadd.f32 0.0, %v1669
        %1671 = vmatmul.bf16.gmra.mxu0 %v1595
        %v1672 = vpop.f32.mrf.mxu0
        %v1673 = vadd.f32 0.0, %v1672
        %v1674 = vpop.f32.mrf.mxu0
        %v1675 = vadd.f32 0.0, %v1674
        %1676 = vmatmul.bf16.gmra.mxu0 %v1598
        %v1677 = vpop.f32.mrf.mxu0
        %v1678 = vadd.f32 0.0, %v1677
        %v1679 = vpop.f32.mrf.mxu0
        %v1680 = vadd.f32 0.0, %v1679
        %1681 = vmatmul.bf16.gmra.mxu0 %v1601
        %v1682 = vpop.f32.mrf.mxu0
        %v1683 = vadd.f32 0.0, %v1682
        %v1684 = vpop.f32.mrf.mxu0
        %v1685 = vadd.f32 0.0, %v1684
        %1686 = vmatmul.bf16.gmra.mxu0 %v1604
        %v1687 = vpop.f32.mrf.mxu0
        %v1688 = vadd.f32 0.0, %v1687
        %v1689 = vpop.f32.mrf.mxu0
        %v1690 = vadd.f32 0.0, %v1689
        %1691 = vmatmul.bf16.gmra.mxu0 %v1607
        %v1692 = vpop.f32.mrf.mxu0
        %v1693 = vadd.f32 0.0, %v1692
        %v1694 = vpop.f32.mrf.mxu0
        %v1695 = vadd.f32 0.0, %v1694
        %1696 = vmatmul.bf16.gmra.mxu0 %v1610
        %v1697 = vpop.f32.mrf.mxu0
        %v1698 = vadd.f32 0.0, %v1697
        %v1699 = vpop.f32.mrf.mxu0
        %v1700 = vadd.f32 0.0, %v1699
        %1701 = vmatmul.bf16.gmra.mxu0 %v1613
        %v1702 = vpop.f32.mrf.mxu0
        %v1703 = vadd.f32 0.0, %v1702
        %v1704 = vpop.f32.mrf.mxu0
        %v1705 = vadd.f32 0.0, %v1704
        %1706 = vdwg.mxu0
        %v1707 = vadd.f32 %v1415, %v1628
        %v1708 = vadd.f32 %v1416, %v1630
        %v1709 = vadd.f32 %v1417, %v1633
        %v1710 = vadd.f32 %v1418, %v1635
        %v1711 = vadd.f32 %v1419, %v1638
        %v1712 = vadd.f32 %v1420, %v1640
        %v1713 = vadd.f32 %v1421, %v1643
        %v1714 = vadd.f32 %v1422, %v1645
        %v1715 = vadd.f32 %v1423, %v1648
        %v1716 = vadd.f32 %v1424, %v1650
        %v1717 = vadd.f32 %v1425, %v1653
        %v1718 = vadd.f32 %v1426, %v1655
        %v1719 = vadd.f32 %v1427, %v1658
        %v1720 = vadd.f32 %v1428, %v1660
        %v1721 = vadd.f32 %v1429, %v1663
        %v1722 = vadd.f32 %v1430, %v1665
        %v1723 = vadd.f32 %v1431, %v1668
        %v1724 = vadd.f32 %v1432, %v1670
        %v1725 = vadd.f32 %v1433, %v1673
        %v1726 = vadd.f32 %v1434, %v1675
        %v1727 = vadd.f32 %v1435, %v1678
        %v1728 = vadd.f32 %v1436, %v1680
        %v1729 = vadd.f32 %v1437, %v1683
        %v1730 = vadd.f32 %v1438, %v1685
        %v1731 = vadd.f32 %v1439, %v1688
        %v1732 = vadd.f32 %v1440, %v1690
        %v1733 = vadd.f32 %v1441, %v1693
        %v1734 = vadd.f32 %v1442, %v1695
        %v1735 = vadd.f32 %v1443, %v1698
        %v1736 = vadd.f32 %v1444, %v1700
        %v1737 = vadd.f32 %v1445, %v1703
        %v1738 = vadd.f32 %v1446, %v1705
        %s1739 = sadd.s32 %s1449, 36
        %s1740 = smul.addr %s1739, 4
        %s1741 = scalar_lea.vmem %s606, %s1740 [#allocation2]
        %v1742 = vld [vmem:[%s1741] sm:$0xf]
        %v1743 = vld [vmem:[%s1741 + $0x4] sm:$0xf]
        %v1744 = vld [vmem:[%s1741 + $0x8] sm:$0xf]
        %v1745 = vld [vmem:[%s1741 + $0xc] sm:$0xf]
        %v1746 = vld [vmem:[%s1741 + $0x10] sm:$0xf]
        %v1747 = vld [vmem:[%s1741 + $0x14] sm:$0xf]
        %v1748 = vld [vmem:[%s1741 + $0x18] sm:$0xf]
        %v1749 = vld [vmem:[%s1741 + $0x1c] sm:$0xf]
        %v1750 = vld [vmem:[%s1741 + $0x20] sm:$0xf]
        %v1751 = vld [vmem:[%s1741 + $0x24] sm:$0xf]
        %v1752 = vld [vmem:[%s1741 + $0x28] sm:$0xf]
        %v1753 = vld [vmem:[%s1741 + $0x2c] sm:$0xf]
        %v1754 = vld [vmem:[%s1741 + $0x30] sm:$0xf]
        %v1755 = vld [vmem:[%s1741 + $0x34] sm:$0xf]
        %v1756 = vld [vmem:[%s1741 + $0x38] sm:$0xf]
        %v1757 = vld [vmem:[%s1741 + $0x3c] sm:$0xf]
        %v1758 = vld [vmem:[%s1741 + $0x40] sm:$0xf]
        %v1759 = vld [vmem:[%s1741 + $0x44] sm:$0xf]
        %v1760 = vld [vmem:[%s1741 + $0x48] sm:$0xf]
        %v1761 = vld [vmem:[%s1741 + $0x4c] sm:$0xf]
        %v1762 = vld [vmem:[%s1741 + $0x50] sm:$0xf]
        %v1763 = vld [vmem:[%s1741 + $0x54] sm:$0xf]
        %v1764 = vld [vmem:[%s1741 + $0x58] sm:$0xf]
        %v1765 = vld [vmem:[%s1741 + $0x5c] sm:$0xf]
        %v1766 = vld [vmem:[%s1741 + $0x60] sm:$0xf]
        %v1767 = vld [vmem:[%s1741 + $0x64] sm:$0xf]
        %v1768 = vld [vmem:[%s1741 + $0x68] sm:$0xf]
        %v1769 = vld [vmem:[%s1741 + $0x6c] sm:$0xf]
        %v1770 = vld [vmem:[%s1741 + $0x70] sm:$0xf]
        %v1771 = vld [vmem:[%s1741 + $0x74] sm:$0xf]
        %v1772 = vld [vmem:[%s1741 + $0x78] sm:$0xf]
        %v1773 = vld [vmem:[%s1741 + $0x7c] sm:$0xf]
        %s1774 = scalar_lea.vmem %s1, 8
        %v1775 = vld [vmem:[%s1774] sm:$0x3]
        %v1808 = vunpack.c.l.b16 %v1742
        %v1809 = vunpack.c.l.b16 %v1743
        %v1810 = vunpack.c.l.b16 %v1744
        %v1811 = vunpack.c.l.b16 %v1745
        %v1812 = vunpack.c.l.b16 %v1746
        %v1813 = vunpack.c.l.b16 %v1747
        %v1814 = vunpack.c.l.b16 %v1748
        %v1815 = vunpack.c.l.b16 %v1749
        %v1816 = vunpack.c.l.b16 %v1750
        %v1817 = vunpack.c.l.b16 %v1751
        %v1818 = vunpack.c.l.b16 %v1752
        %v1819 = vunpack.c.l.b16 %v1753
        %v1820 = vunpack.c.l.b16 %v1754
        %v1821 = vunpack.c.l.b16 %v1755
        %v1822 = vunpack.c.l.b16 %v1756
        %v1823 = vunpack.c.l.b16 %v1757
        %v1824 = vunpack.c.l.b16 %v1758
        %v1825 = vunpack.c.l.b16 %v1759
        %v1826 = vunpack.c.l.b16 %v1760
        %v1827 = vunpack.c.l.b16 %v1761
        %v1828 = vunpack.c.l.b16 %v1762
        %v1829 = vunpack.c.l.b16 %v1763
        %v1830 = vunpack.c.l.b16 %v1764
        %v1831 = vunpack.c.l.b16 %v1765
        %v1832 = vunpack.c.l.b16 %v1766
        %v1833 = vunpack.c.l.b16 %v1767
        %v1834 = vunpack.c.l.b16 %v1768
        %v1835 = vunpack.c.l.b16 %v1769
        %v1836 = vunpack.c.l.b16 %v1770
        %v1837 = vunpack.c.l.b16 %v1771
        %v1838 = vunpack.c.l.b16 %v1772
        %v1839 = vunpack.c.l.b16 %v1773
        %v1840 = vpack.c.b16 %v1809, %v1808
        %v1841 = vpack.c.b16 %v1811, %v1810
        %v1842 = vpack.c.b16 %v1813, %v1812
        %v1843 = vpack.c.b16 %v1815, %v1814
        %v1844 = vpack.c.b16 %v1817, %v1816
        %v1845 = vpack.c.b16 %v1819, %v1818
        %v1846 = vpack.c.b16 %v1821, %v1820
        %v1847 = vpack.c.b16 %v1823, %v1822
        %v1848 = vpack.c.b16 %v1825, %v1824
        %v1849 = vpack.c.b16 %v1827, %v1826
        %v1850 = vpack.c.b16 %v1829, %v1828
        %v1851 = vpack.c.b16 %v1831, %v1830
        %v1852 = vpack.c.b16 %v1833, %v1832
        %v1853 = vpack.c.b16 %v1835, %v1834
        %v1854 = vpack.c.b16 %v1837, %v1836
        %v1855 = vpack.c.b16 %v1839, %v1838
        %v1857 = vsel %vm796, %v1840, 0
        %v1860 = vsel %vm796, %v1841, 0
        %v1863 = vsel %vm796, %v1842, 0
        %v1866 = vsel %vm796, %v1843, 0
        %v1869 = vsel %vm796, %v1844, 0
        %v1872 = vsel %vm796, %v1845, 0
        %v1875 = vsel %vm796, %v1846, 0
        %v1878 = vsel %vm796, %v1847, 0
        %v1881 = vsel %vm796, %v1848, 0
        %v1884 = vsel %vm796, %v1849, 0
        %v1887 = vsel %vm796, %v1850, 0
        %v1890 = vsel %vm796, %v1851, 0
        %v1893 = vsel %vm796, %v1852, 0
        %v1896 = vsel %vm796, %v1853, 0
        %v1899 = vsel %vm796, %v1854, 0
        %v1902 = vsel %vm796, %v1855, 0
        %v1905 = vsel %vm845, %v1775, 0
        %1907 = vmatpush.bf16.msra.mxu0 0
        %1908 = vmatpush.bf16.msra.mxu0 0
        %1909 = vmatpush.bf16.msra.mxu0 0
        %1910 = vmatpush.bf16.msra.mxu0 0
        %1911 = vmatpush.bf16.msra.mxu0 0
        %1912 = vmatpush.bf16.msra.mxu0 0
        %1913 = vmatpush.bf16.msra.mxu0 0
        %1914 = vmatpush.bf16.msra.mxu0 %v1905
        %1915 = vmatmul.bf16.gmra.mxu0 %v1857
        %v1916 = vpop.f32.mrf.mxu0
        %v1917 = vadd.f32 0.0, %v1916
        %v1918 = vpop.f32.mrf.mxu0
        %v1919 = vadd.f32 0.0, %v1918
        %1920 = vmatmul.bf16.gmra.mxu0 %v1860
        %v1921 = vpop.f32.mrf.mxu0
        %v1922 = vadd.f32 0.0, %v1921
        %v1923 = vpop.f32.mrf.mxu0
        %v1924 = vadd.f32 0.0, %v1923
        %1925 = vmatmul.bf16.gmra.mxu0 %v1863
        %v1926 = vpop.f32.mrf.mxu0
        %v1927 = vadd.f32 0.0, %v1926
        %v1928 = vpop.f32.mrf.mxu0
        %v1929 = vadd.f32 0.0, %v1928
        %1930 = vmatmul.bf16.gmra.mxu0 %v1866
        %v1931 = vpop.f32.mrf.mxu0
        %v1932 = vadd.f32 0.0, %v1931
        %v1933 = vpop.f32.mrf.mxu0
        %v1934 = vadd.f32 0.0, %v1933
        %1935 = vmatmul.bf16.gmra.mxu0 %v1869
        %v1936 = vpop.f32.mrf.mxu0
        %v1937 = vadd.f32 0.0, %v1936
        %v1938 = vpop.f32.mrf.mxu0
        %v1939 = vadd.f32 0.0, %v1938
        %1940 = vmatmul.bf16.gmra.mxu0 %v1872
        %v1941 = vpop.f32.mrf.mxu0
        %v1942 = vadd.f32 0.0, %v1941
        %v1943 = vpop.f32.mrf.mxu0
        %v1944 = vadd.f32 0.0, %v1943
        %1945 = vmatmul.bf16.gmra.mxu0 %v1875
        %v1946 = vpop.f32.mrf.mxu0
        %v1947 = vadd.f32 0.0, %v1946
        %v1948 = vpop.f32.mrf.mxu0
        %v1949 = vadd.f32 0.0, %v1948
        %1950 = vmatmul.bf16.gmra.mxu0 %v1878
        %v1951 = vpop.f32.mrf.mxu0
        %v1952 = vadd.f32 0.0, %v1951
        %v1953 = vpop.f32.mrf.mxu0
        %v1954 = vadd.f32 0.0, %v1953
        %1955 = vmatmul.bf16.gmra.mxu0 %v1881
        %v1956 = vpop.f32.mrf.mxu0
        %v1957 = vadd.f32 0.0, %v1956
        %v1958 = vpop.f32.mrf.mxu0
        %v1959 = vadd.f32 0.0, %v1958
        %1960 = vmatmul.bf16.gmra.mxu0 %v1884
        %v1961 = vpop.f32.mrf.mxu0
        %v1962 = vadd.f32 0.0, %v1961
        %v1963 = vpop.f32.mrf.mxu0
        %v1964 = vadd.f32 0.0, %v1963
        %1965 = vmatmul.bf16.gmra.mxu0 %v1887
        %v1966 = vpop.f32.mrf.mxu0
        %v1967 = vadd.f32 0.0, %v1966
        %v1968 = vpop.f32.mrf.mxu0
        %v1969 = vadd.f32 0.0, %v1968
        %1970 = vmatmul.bf16.gmra.mxu0 %v1890
        %v1971 = vpop.f32.mrf.mxu0
        %v1972 = vadd.f32 0.0, %v1971
        %v1973 = vpop.f32.mrf.mxu0
        %v1974 = vadd.f32 0.0, %v1973
        %1975 = vmatmul.bf16.gmra.mxu0 %v1893
        %v1976 = vpop.f32.mrf.mxu0
        %v1977 = vadd.f32 0.0, %v1976
        %v1978 = vpop.f32.mrf.mxu0
        %v1979 = vadd.f32 0.0, %v1978
        %1980 = vmatmul.bf16.gmra.mxu0 %v1896
        %v1981 = vpop.f32.mrf.mxu0
        %v1982 = vadd.f32 0.0, %v1981
        %v1983 = vpop.f32.mrf.mxu0
        %v1984 = vadd.f32 0.0, %v1983
        %1985 = vmatmul.bf16.gmra.mxu0 %v1899
        %v1986 = vpop.f32.mrf.mxu0
        %v1987 = vadd.f32 0.0, %v1986
        %v1988 = vpop.f32.mrf.mxu0
        %v1989 = vadd.f32 0.0, %v1988
        %1990 = vmatmul.bf16.gmra.mxu0 %v1902
        %v1991 = vpop.f32.mrf.mxu0
        %v1992 = vadd.f32 0.0, %v1991
        %v1993 = vpop.f32.mrf.mxu0
        %v1994 = vadd.f32 0.0, %v1993
        %1995 = vdwg.mxu0
        %v1996 = vadd.f32 %v1707, %v1917
        %v1997 = vadd.f32 %v1708, %v1919
        %v1998 = vadd.f32 %v1709, %v1922
        %v1999 = vadd.f32 %v1710, %v1924
        %v2000 = vadd.f32 %v1711, %v1927
        %v2001 = vadd.f32 %v1712, %v1929
        %v2002 = vadd.f32 %v1713, %v1932
        %v2003 = vadd.f32 %v1714, %v1934
        %v2004 = vadd.f32 %v1715, %v1937
        %v2005 = vadd.f32 %v1716, %v1939
        %v2006 = vadd.f32 %v1717, %v1942
        %v2007 = vadd.f32 %v1718, %v1944
        %v2008 = vadd.f32 %v1719, %v1947
        %v2009 = vadd.f32 %v1720, %v1949
        %v2010 = vadd.f32 %v1721, %v1952
        %v2011 = vadd.f32 %v1722, %v1954
        %v2012 = vadd.f32 %v1723, %v1957
        %v2013 = vadd.f32 %v1724, %v1959
        %v2014 = vadd.f32 %v1725, %v1962
        %v2015 = vadd.f32 %v1726, %v1964
        %v2016 = vadd.f32 %v1727, %v1967
        %v2017 = vadd.f32 %v1728, %v1969
        %v2018 = vadd.f32 %v1729, %v1972
        %v2019 = vadd.f32 %v1730, %v1974
        %v2020 = vadd.f32 %v1731, %v1977
        %v2021 = vadd.f32 %v1732, %v1979
        %v2022 = vadd.f32 %v1733, %v1982
        %v2023 = vadd.f32 %v1734, %v1984
        %v2024 = vadd.f32 %v1735, %v1987
        %v2025 = vadd.f32 %v1736, %v1989
        %v2026 = vadd.f32 %v1737, %v1992
        %v2027 = vadd.f32 %v1738, %v1994
        %s2028 = sadd.s32 %s1449, 72
        %s2029 = smul.addr %s2028, 4
        %s2030 = scalar_lea.vmem %s606, %s2029 [#allocation2]
        %v2031 = vld [vmem:[%s2030] sm:$0xf]
        %v2032 = vld [vmem:[%s2030 + $0x4] sm:$0xf]
        %v2033 = vld [vmem:[%s2030 + $0x8] sm:$0xf]
        %v2034 = vld [vmem:[%s2030 + $0xc] sm:$0xf]
        %v2035 = vld [vmem:[%s2030 + $0x10] sm:$0xf]
        %v2036 = vld [vmem:[%s2030 + $0x14] sm:$0xf]
        %v2037 = vld [vmem:[%s2030 + $0x18] sm:$0xf]
        %v2038 = vld [vmem:[%s2030 + $0x1c] sm:$0xf]
        %v2039 = vld [vmem:[%s2030 + $0x20] sm:$0xf]
        %v2040 = vld [vmem:[%s2030 + $0x24] sm:$0xf]
        %v2041 = vld [vmem:[%s2030 + $0x28] sm:$0xf]
        %v2042 = vld [vmem:[%s2030 + $0x2c] sm:$0xf]
        %v2043 = vld [vmem:[%s2030 + $0x30] sm:$0xf]
        %v2044 = vld [vmem:[%s2030 + $0x34] sm:$0xf]
        %v2045 = vld [vmem:[%s2030 + $0x38] sm:$0xf]
        %v2046 = vld [vmem:[%s2030 + $0x3c] sm:$0xf]
        %v2047 = vld [vmem:[%s2030 + $0x40] sm:$0xf]
        %v2048 = vld [vmem:[%s2030 + $0x44] sm:$0xf]
        %v2049 = vld [vmem:[%s2030 + $0x48] sm:$0xf]
        %v2050 = vld [vmem:[%s2030 + $0x4c] sm:$0xf]
        %v2051 = vld [vmem:[%s2030 + $0x50] sm:$0xf]
        %v2052 = vld [vmem:[%s2030 + $0x54] sm:$0xf]
        %v2053 = vld [vmem:[%s2030 + $0x58] sm:$0xf]
        %v2054 = vld [vmem:[%s2030 + $0x5c] sm:$0xf]
        %v2055 = vld [vmem:[%s2030 + $0x60] sm:$0xf]
        %v2056 = vld [vmem:[%s2030 + $0x64] sm:$0xf]
        %v2057 = vld [vmem:[%s2030 + $0x68] sm:$0xf]
        %v2058 = vld [vmem:[%s2030 + $0x6c] sm:$0xf]
        %v2059 = vld [vmem:[%s2030 + $0x70] sm:$0xf]
        %v2060 = vld [vmem:[%s2030 + $0x74] sm:$0xf]
        %v2061 = vld [vmem:[%s2030 + $0x78] sm:$0xf]
        %v2062 = vld [vmem:[%s2030 + $0x7c] sm:$0xf]
        %s2063 = scalar_lea.vmem %s1, 10
        %v2064 = vld [vmem:[%s2063] sm:$0x3]
        %v2097 = vunpack.c.l.b16 %v2031
        %v2098 = vunpack.c.l.b16 %v2032
        %v2099 = vunpack.c.l.b16 %v2033
        %v2100 = vunpack.c.l.b16 %v2034
        %v2101 = vunpack.c.l.b16 %v2035
        %v2102 = vunpack.c.l.b16 %v2036
        %v2103 = vunpack.c.l.b16 %v2037
        %v2104 = vunpack.c.l.b16 %v2038
        %v2105 = vunpack.c.l.b16 %v2039
        %v2106 = vunpack.c.l.b16 %v2040
        %v2107 = vunpack.c.l.b16 %v2041
        %v2108 = vunpack.c.l.b16 %v2042
        %v2109 = vunpack.c.l.b16 %v2043
        %v2110 = vunpack.c.l.b16 %v2044
        %v2111 = vunpack.c.l.b16 %v2045
        %v2112 = vunpack.c.l.b16 %v2046
        %v2113 = vunpack.c.l.b16 %v2047
        %v2114 = vunpack.c.l.b16 %v2048
        %v2115 = vunpack.c.l.b16 %v2049
        %v2116 = vunpack.c.l.b16 %v2050
        %v2117 = vunpack.c.l.b16 %v2051
        %v2118 = vunpack.c.l.b16 %v2052
        %v2119 = vunpack.c.l.b16 %v2053
        %v2120 = vunpack.c.l.b16 %v2054
        %v2121 = vunpack.c.l.b16 %v2055
        %v2122 = vunpack.c.l.b16 %v2056
        %v2123 = vunpack.c.l.b16 %v2057
        %v2124 = vunpack.c.l.b16 %v2058
        %v2125 = vunpack.c.l.b16 %v2059
        %v2126 = vunpack.c.l.b16 %v2060
        %v2127 = vunpack.c.l.b16 %v2061
        %v2128 = vunpack.c.l.b16 %v2062
        %v2129 = vpack.c.b16 %v2098, %v2097
        %v2130 = vpack.c.b16 %v2100, %v2099
        %v2131 = vpack.c.b16 %v2102, %v2101
        %v2132 = vpack.c.b16 %v2104, %v2103
        %v2133 = vpack.c.b16 %v2106, %v2105
        %v2134 = vpack.c.b16 %v2108, %v2107
        %v2135 = vpack.c.b16 %v2110, %v2109
        %v2136 = vpack.c.b16 %v2112, %v2111
        %v2137 = vpack.c.b16 %v2114, %v2113
        %v2138 = vpack.c.b16 %v2116, %v2115
        %v2139 = vpack.c.b16 %v2118, %v2117
        %v2140 = vpack.c.b16 %v2120, %v2119
        %v2141 = vpack.c.b16 %v2122, %v2121
        %v2142 = vpack.c.b16 %v2124, %v2123
        %v2143 = vpack.c.b16 %v2126, %v2125
        %v2144 = vpack.c.b16 %v2128, %v2127
        %v2146 = vsel %vm796, %v2129, 0
        %v2149 = vsel %vm796, %v2130, 0
        %v2152 = vsel %vm796, %v2131, 0
        %v2155 = vsel %vm796, %v2132, 0
        %v2158 = vsel %vm796, %v2133, 0
        %v2161 = vsel %vm796, %v2134, 0
        %v2164 = vsel %vm796, %v2135, 0
        %v2167 = vsel %vm796, %v2136, 0
        %v2170 = vsel %vm796, %v2137, 0
        %v2173 = vsel %vm796, %v2138, 0
        %v2176 = vsel %vm796, %v2139, 0
        %v2179 = vsel %vm796, %v2140, 0
        %v2182 = vsel %vm796, %v2141, 0
        %v2185 = vsel %vm796, %v2142, 0
        %v2188 = vsel %vm796, %v2143, 0
        %v2191 = vsel %vm796, %v2144, 0
        %v2194 = vsel %vm845, %v2064, 0
        %2196 = vmatpush.bf16.msra.mxu0 0
        %2197 = vmatpush.bf16.msra.mxu0 0
        %2198 = vmatpush.bf16.msra.mxu0 0
        %2199 = vmatpush.bf16.msra.mxu0 0
        %2200 = vmatpush.bf16.msra.mxu0 0
        %2201 = vmatpush.bf16.msra.mxu0 0
        %2202 = vmatpush.bf16.msra.mxu0 0
        %2203 = vmatpush.bf16.msra.mxu0 %v2194
        %2204 = vmatmul.bf16.gmra.mxu0 %v2146
        %v2205 = vpop.f32.mrf.mxu0
        %v2206 = vadd.f32 0.0, %v2205
        %v2207 = vpop.f32.mrf.mxu0
        %v2208 = vadd.f32 0.0, %v2207
        %2209 = vmatmul.bf16.gmra.mxu0 %v2149
        %v2210 = vpop.f32.mrf.mxu0
        %v2211 = vadd.f32 0.0, %v2210
        %v2212 = vpop.f32.mrf.mxu0
        %v2213 = vadd.f32 0.0, %v2212
        %2214 = vmatmul.bf16.gmra.mxu0 %v2152
        %v2215 = vpop.f32.mrf.mxu0
        %v2216 = vadd.f32 0.0, %v2215
        %v2217 = vpop.f32.mrf.mxu0
        %v2218 = vadd.f32 0.0, %v2217
        %2219 = vmatmul.bf16.gmra.mxu0 %v2155
        %v2220 = vpop.f32.mrf.mxu0
        %v2221 = vadd.f32 0.0, %v2220
        %v2222 = vpop.f32.mrf.mxu0
        %v2223 = vadd.f32 0.0, %v2222
        %2224 = vmatmul.bf16.gmra.mxu0 %v2158
        %v2225 = vpop.f32.mrf.mxu0
        %v2226 = vadd.f32 0.0, %v2225
        %v2227 = vpop.f32.mrf.mxu0
        %v2228 = vadd.f32 0.0, %v2227
        %2229 = vmatmul.bf16.gmra.mxu0 %v2161
        %v2230 = vpop.f32.mrf.mxu0
        %v2231 = vadd.f32 0.0, %v2230
        %v2232 = vpop.f32.mrf.mxu0
        %v2233 = vadd.f32 0.0, %v2232
        %2234 = vmatmul.bf16.gmra.mxu0 %v2164
        %v2235 = vpop.f32.mrf.mxu0
        %v2236 = vadd.f32 0.0, %v2235
        %v2237 = vpop.f32.mrf.mxu0
        %v2238 = vadd.f32 0.0, %v2237
        %2239 = vmatmul.bf16.gmra.mxu0 %v2167
        %v2240 = vpop.f32.mrf.mxu0
        %v2241 = vadd.f32 0.0, %v2240
        %v2242 = vpop.f32.mrf.mxu0
        %v2243 = vadd.f32 0.0, %v2242
        %2244 = vmatmul.bf16.gmra.mxu0 %v2170
        %v2245 = vpop.f32.mrf.mxu0
        %v2246 = vadd.f32 0.0, %v2245
        %v2247 = vpop.f32.mrf.mxu0
        %v2248 = vadd.f32 0.0, %v2247
        %2249 = vmatmul.bf16.gmra.mxu0 %v2173
        %v2250 = vpop.f32.mrf.mxu0
        %v2251 = vadd.f32 0.0, %v2250
        %v2252 = vpop.f32.mrf.mxu0
        %v2253 = vadd.f32 0.0, %v2252
        %2254 = vmatmul.bf16.gmra.mxu0 %v2176
        %v2255 = vpop.f32.mrf.mxu0
        %v2256 = vadd.f32 0.0, %v2255
        %v2257 = vpop.f32.mrf.mxu0
        %v2258 = vadd.f32 0.0, %v2257
        %2259 = vmatmul.bf16.gmra.mxu0 %v2179
        %v2260 = vpop.f32.mrf.mxu0
        %v2261 = vadd.f32 0.0, %v2260
        %v2262 = vpop.f32.mrf.mxu0
        %v2263 = vadd.f32 0.0, %v2262
        %2264 = vmatmul.bf16.gmra.mxu0 %v2182
        %v2265 = vpop.f32.mrf.mxu0
        %v2266 = vadd.f32 0.0, %v2265
        %v2267 = vpop.f32.mrf.mxu0
        %v2268 = vadd.f32 0.0, %v2267
        %2269 = vmatmul.bf16.gmra.mxu0 %v2185
        %v2270 = vpop.f32.mrf.mxu0
        %v2271 = vadd.f32 0.0, %v2270
        %v2272 = vpop.f32.mrf.mxu0
        %v2273 = vadd.f32 0.0, %v2272
        %2274 = vmatmul.bf16.gmra.mxu0 %v2188
        %v2275 = vpop.f32.mrf.mxu0
        %v2276 = vadd.f32 0.0, %v2275
        %v2277 = vpop.f32.mrf.mxu0
        %v2278 = vadd.f32 0.0, %v2277
        %2279 = vmatmul.bf16.gmra.mxu0 %v2191
        %v2280 = vpop.f32.mrf.mxu0
        %v2281 = vadd.f32 0.0, %v2280
        %v2282 = vpop.f32.mrf.mxu0
        %v2283 = vadd.f32 0.0, %v2282
        %2284 = vdwg.mxu0
        %v2285 = vadd.f32 %v1996, %v2206
        %v2286 = vadd.f32 %v1997, %v2208
        %v2287 = vadd.f32 %v1998, %v2211
        %v2288 = vadd.f32 %v1999, %v2213
        %v2289 = vadd.f32 %v2000, %v2216
        %v2290 = vadd.f32 %v2001, %v2218
        %v2291 = vadd.f32 %v2002, %v2221
        %v2292 = vadd.f32 %v2003, %v2223
        %v2293 = vadd.f32 %v2004, %v2226
        %v2294 = vadd.f32 %v2005, %v2228
        %v2295 = vadd.f32 %v2006, %v2231
        %v2296 = vadd.f32 %v2007, %v2233
        %v2297 = vadd.f32 %v2008, %v2236
        %v2298 = vadd.f32 %v2009, %v2238
        %v2299 = vadd.f32 %v2010, %v2241
        %v2300 = vadd.f32 %v2011, %v2243
        %v2301 = vadd.f32 %v2012, %v2246
        %v2302 = vadd.f32 %v2013, %v2248
        %v2303 = vadd.f32 %v2014, %v2251
        %v2304 = vadd.f32 %v2015, %v2253
        %v2305 = vadd.f32 %v2016, %v2256
        %v2306 = vadd.f32 %v2017, %v2258
        %v2307 = vadd.f32 %v2018, %v2261
        %v2308 = vadd.f32 %v2019, %v2263
        %v2309 = vadd.f32 %v2020, %v2266
        %v2310 = vadd.f32 %v2021, %v2268
        %v2311 = vadd.f32 %v2022, %v2271
        %v2312 = vadd.f32 %v2023, %v2273
        %v2313 = vadd.f32 %v2024, %v2276
        %v2314 = vadd.f32 %v2025, %v2278
        %v2315 = vadd.f32 %v2026, %v2281
        %v2316 = vadd.f32 %v2027, %v2283
        %s2317 = sadd.s32 %s640, 2
        %s2318 = smul.u32 %s2317, 16
        %s2319 = sshra.s32 %s2318, 3
        %s2320 = sand.u32 %s2318, 7
        %s2321 = smul.addr %s2319, 4
        %s2322 = scalar_lea.vmem %s606, %s2321 [#allocation2]
        %v2323 = vld [vmem:[%s2322] sm:$0xf]
        %v2324 = vld [vmem:[%s2322 + $0x4] sm:$0xf]
        %v2325 = vld [vmem:[%s2322 + $0x8] sm:$0xf]
        %v2326 = vld [vmem:[%s2322 + $0xc] sm:$0xf]
        %v2327 = vld [vmem:[%s2322 + $0x10] sm:$0xf]
        %v2328 = vld [vmem:[%s2322 + $0x14] sm:$0xf]
        %v2329 = vld [vmem:[%s2322 + $0x18] sm:$0xf]
        %v2330 = vld [vmem:[%s2322 + $0x1c] sm:$0xf]
        %v2331 = vld [vmem:[%s2322 + $0x20] sm:$0xf]
        %v2332 = vld [vmem:[%s2322 + $0x24] sm:$0xf]
        %v2333 = vld [vmem:[%s2322 + $0x28] sm:$0xf]
        %v2334 = vld [vmem:[%s2322 + $0x2c] sm:$0xf]
        %v2335 = vld [vmem:[%s2322 + $0x30] sm:$0xf]
        %v2336 = vld [vmem:[%s2322 + $0x34] sm:$0xf]
        %v2337 = vld [vmem:[%s2322 + $0x38] sm:$0xf]
        %v2338 = vld [vmem:[%s2322 + $0x3c] sm:$0xf]
        %v2339 = vld [vmem:[%s2322 + $0x40] sm:$0xf]
        %v2340 = vld [vmem:[%s2322 + $0x44] sm:$0xf]
        %v2341 = vld [vmem:[%s2322 + $0x48] sm:$0xf]
        %v2342 = vld [vmem:[%s2322 + $0x4c] sm:$0xf]
        %v2343 = vld [vmem:[%s2322 + $0x50] sm:$0xf]
        %v2344 = vld [vmem:[%s2322 + $0x54] sm:$0xf]
        %v2345 = vld [vmem:[%s2322 + $0x58] sm:$0xf]
        %v2346 = vld [vmem:[%s2322 + $0x5c] sm:$0xf]
        %v2347 = vld [vmem:[%s2322 + $0x60] sm:$0xf]
        %v2348 = vld [vmem:[%s2322 + $0x64] sm:$0xf]
        %v2349 = vld [vmem:[%s2322 + $0x68] sm:$0xf]
        %v2350 = vld [vmem:[%s2322 + $0x6c] sm:$0xf]
        %v2351 = vld [vmem:[%s2322 + $0x70] sm:$0xf]
        %v2352 = vld [vmem:[%s2322 + $0x74] sm:$0xf]
        %v2353 = vld [vmem:[%s2322 + $0x78] sm:$0xf]
        %v2354 = vld [vmem:[%s2322 + $0x7c] sm:$0xf]
        %s2355 = scalar_lea.vmem %s1, 12
        %v2356 = vld [vmem:[%s2355] sm:$0x3]
        %v2389 = vunpack.c.l.b16 %v2323
        %v2390 = vunpack.c.l.b16 %v2324
        %v2391 = vunpack.c.l.b16 %v2325
        %v2392 = vunpack.c.l.b16 %v2326
        %v2393 = vunpack.c.l.b16 %v2327
        %v2394 = vunpack.c.l.b16 %v2328
        %v2395 = vunpack.c.l.b16 %v2329
        %v2396 = vunpack.c.l.b16 %v2330
        %v2397 = vunpack.c.l.b16 %v2331
        %v2398 = vunpack.c.l.b16 %v2332
        %v2399 = vunpack.c.l.b16 %v2333
        %v2400 = vunpack.c.l.b16 %v2334
        %v2401 = vunpack.c.l.b16 %v2335
        %v2402 = vunpack.c.l.b16 %v2336
        %v2403 = vunpack.c.l.b16 %v2337
        %v2404 = vunpack.c.l.b16 %v2338
        %v2405 = vunpack.c.l.b16 %v2339
        %v2406 = vunpack.c.l.b16 %v2340
        %v2407 = vunpack.c.l.b16 %v2341
        %v2408 = vunpack.c.l.b16 %v2342
        %v2409 = vunpack.c.l.b16 %v2343
        %v2410 = vunpack.c.l.b16 %v2344
        %v2411 = vunpack.c.l.b16 %v2345
        %v2412 = vunpack.c.l.b16 %v2346
        %v2413 = vunpack.c.l.b16 %v2347
        %v2414 = vunpack.c.l.b16 %v2348
        %v2415 = vunpack.c.l.b16 %v2349
        %v2416 = vunpack.c.l.b16 %v2350
        %v2417 = vunpack.c.l.b16 %v2351
        %v2418 = vunpack.c.l.b16 %v2352
        %v2419 = vunpack.c.l.b16 %v2353
        %v2420 = vunpack.c.l.b16 %v2354
        %v2421 = vpack.c.b16 %v2390, %v2389
        %v2422 = vpack.c.b16 %v2392, %v2391
        %v2423 = vpack.c.b16 %v2394, %v2393
        %v2424 = vpack.c.b16 %v2396, %v2395
        %v2425 = vpack.c.b16 %v2398, %v2397
        %v2426 = vpack.c.b16 %v2400, %v2399
        %v2427 = vpack.c.b16 %v2402, %v2401
        %v2428 = vpack.c.b16 %v2404, %v2403
        %v2429 = vpack.c.b16 %v2406, %v2405
        %v2430 = vpack.c.b16 %v2408, %v2407
        %v2431 = vpack.c.b16 %v2410, %v2409
        %v2432 = vpack.c.b16 %v2412, %v2411
        %v2433 = vpack.c.b16 %v2414, %v2413
        %v2434 = vpack.c.b16 %v2416, %v2415
        %v2435 = vpack.c.b16 %v2418, %v2417
        %v2436 = vpack.c.b16 %v2420, %v2419
        %v2438 = vsel %vm796, %v2421, 0
        %v2441 = vsel %vm796, %v2422, 0
        %v2444 = vsel %vm796, %v2423, 0
        %v2447 = vsel %vm796, %v2424, 0
        %v2450 = vsel %vm796, %v2425, 0
        %v2453 = vsel %vm796, %v2426, 0
        %v2456 = vsel %vm796, %v2427, 0
        %v2459 = vsel %vm796, %v2428, 0
        %v2462 = vsel %vm796, %v2429, 0
        %v2465 = vsel %vm796, %v2430, 0
        %v2468 = vsel %vm796, %v2431, 0
        %v2471 = vsel %vm796, %v2432, 0
        %v2474 = vsel %vm796, %v2433, 0
        %v2477 = vsel %vm796, %v2434, 0
        %v2480 = vsel %vm796, %v2435, 0
        %v2483 = vsel %vm796, %v2436, 0
        %v2486 = vsel %vm845, %v2356, 0
        %2488 = vmatpush.bf16.msra.mxu0 0
        %2489 = vmatpush.bf16.msra.mxu0 0
        %2490 = vmatpush.bf16.msra.mxu0 0
        %2491 = vmatpush.bf16.msra.mxu0 0
        %2492 = vmatpush.bf16.msra.mxu0 0
        %2493 = vmatpush.bf16.msra.mxu0 0
        %2494 = vmatpush.bf16.msra.mxu0 0
        %2495 = vmatpush.bf16.msra.mxu0 %v2486
        %2496 = vmatmul.bf16.gmra.mxu0 %v2438
        %v2497 = vpop.f32.mrf.mxu0
        %v2498 = vadd.f32 0.0, %v2497
        %v2499 = vpop.f32.mrf.mxu0
        %v2500 = vadd.f32 0.0, %v2499
        %2501 = vmatmul.bf16.gmra.mxu0 %v2441
        %v2502 = vpop.f32.mrf.mxu0
        %v2503 = vadd.f32 0.0, %v2502
        %v2504 = vpop.f32.mrf.mxu0
        %v2505 = vadd.f32 0.0, %v2504
        %2506 = vmatmul.bf16.gmra.mxu0 %v2444
        %v2507 = vpop.f32.mrf.mxu0
        %v2508 = vadd.f32 0.0, %v2507
        %v2509 = vpop.f32.mrf.mxu0
        %v2510 = vadd.f32 0.0, %v2509
        %2511 = vmatmul.bf16.gmra.mxu0 %v2447
        %v2512 = vpop.f32.mrf.mxu0
        %v2513 = vadd.f32 0.0, %v2512
        %v2514 = vpop.f32.mrf.mxu0
        %v2515 = vadd.f32 0.0, %v2514
        %2516 = vmatmul.bf16.gmra.mxu0 %v2450
        %v2517 = vpop.f32.mrf.mxu0
        %v2518 = vadd.f32 0.0, %v2517
        %v2519 = vpop.f32.mrf.mxu0
        %v2520 = vadd.f32 0.0, %v2519
        %2521 = vmatmul.bf16.gmra.mxu0 %v2453
        %v2522 = vpop.f32.mrf.mxu0
        %v2523 = vadd.f32 0.0, %v2522
        %v2524 = vpop.f32.mrf.mxu0
        %v2525 = vadd.f32 0.0, %v2524
        %2526 = vmatmul.bf16.gmra.mxu0 %v2456
        %v2527 = vpop.f32.mrf.mxu0
        %v2528 = vadd.f32 0.0, %v2527
        %v2529 = vpop.f32.mrf.mxu0
        %v2530 = vadd.f32 0.0, %v2529
        %2531 = vmatmul.bf16.gmra.mxu0 %v2459
        %v2532 = vpop.f32.mrf.mxu0
        %v2533 = vadd.f32 0.0, %v2532
        %v2534 = vpop.f32.mrf.mxu0
        %v2535 = vadd.f32 0.0, %v2534
        %2536 = vmatmul.bf16.gmra.mxu0 %v2462
        %v2537 = vpop.f32.mrf.mxu0
        %v2538 = vadd.f32 0.0, %v2537
        %v2539 = vpop.f32.mrf.mxu0
        %v2540 = vadd.f32 0.0, %v2539
        %2541 = vmatmul.bf16.gmra.mxu0 %v2465
        %v2542 = vpop.f32.mrf.mxu0
        %v2543 = vadd.f32 0.0, %v2542
        %v2544 = vpop.f32.mrf.mxu0
        %v2545 = vadd.f32 0.0, %v2544
        %2546 = vmatmul.bf16.gmra.mxu0 %v2468
        %v2547 = vpop.f32.mrf.mxu0
        %v2548 = vadd.f32 0.0, %v2547
        %v2549 = vpop.f32.mrf.mxu0
        %v2550 = vadd.f32 0.0, %v2549
        %2551 = vmatmul.bf16.gmra.mxu0 %v2471
        %v2552 = vpop.f32.mrf.mxu0
        %v2553 = vadd.f32 0.0, %v2552
        %v2554 = vpop.f32.mrf.mxu0
        %v2555 = vadd.f32 0.0, %v2554
        %2556 = vmatmul.bf16.gmra.mxu0 %v2474
        %v2557 = vpop.f32.mrf.mxu0
        %v2558 = vadd.f32 0.0, %v2557
        %v2559 = vpop.f32.mrf.mxu0
        %v2560 = vadd.f32 0.0, %v2559
        %2561 = vmatmul.bf16.gmra.mxu0 %v2477
        %v2562 = vpop.f32.mrf.mxu0
        %v2563 = vadd.f32 0.0, %v2562
        %v2564 = vpop.f32.mrf.mxu0
        %v2565 = vadd.f32 0.0, %v2564
        %2566 = vmatmul.bf16.gmra.mxu0 %v2480
        %v2567 = vpop.f32.mrf.mxu0
        %v2568 = vadd.f32 0.0, %v2567
        %v2569 = vpop.f32.mrf.mxu0
        %v2570 = vadd.f32 0.0, %v2569
        %2571 = vmatmul.bf16.gmra.mxu0 %v2483
        %v2572 = vpop.f32.mrf.mxu0
        %v2573 = vadd.f32 0.0, %v2572
        %v2574 = vpop.f32.mrf.mxu0
        %v2575 = vadd.f32 0.0, %v2574
        %2576 = vdwg.mxu0
        %v2577 = vadd.f32 %v2285, %v2498
        %v2578 = vadd.f32 %v2286, %v2500
        %v2579 = vadd.f32 %v2287, %v2503
        %v2580 = vadd.f32 %v2288, %v2505
        %v2581 = vadd.f32 %v2289, %v2508
        %v2582 = vadd.f32 %v2290, %v2510
        %v2583 = vadd.f32 %v2291, %v2513
        %v2584 = vadd.f32 %v2292, %v2515
        %v2585 = vadd.f32 %v2293, %v2518
        %v2586 = vadd.f32 %v2294, %v2520
        %v2587 = vadd.f32 %v2295, %v2523
        %v2588 = vadd.f32 %v2296, %v2525
        %v2589 = vadd.f32 %v2297, %v2528
        %v2590 = vadd.f32 %v2298, %v2530
        %v2591 = vadd.f32 %v2299, %v2533
        %v2592 = vadd.f32 %v2300, %v2535
        %v2593 = vadd.f32 %v2301, %v2538
        %v2594 = vadd.f32 %v2302, %v2540
        %v2595 = vadd.f32 %v2303, %v2543
        %v2596 = vadd.f32 %v2304, %v2545
        %v2597 = vadd.f32 %v2305, %v2548
        %v2598 = vadd.f32 %v2306, %v2550
        %v2599 = vadd.f32 %v2307, %v2553
        %v2600 = vadd.f32 %v2308, %v2555
        %v2601 = vadd.f32 %v2309, %v2558
        %v2602 = vadd.f32 %v2310, %v2560
        %v2603 = vadd.f32 %v2311, %v2563
        %v2604 = vadd.f32 %v2312, %v2565
        %v2605 = vadd.f32 %v2313, %v2568
        %v2606 = vadd.f32 %v2314, %v2570
        %v2607 = vadd.f32 %v2315, %v2573
        %v2608 = vadd.f32 %v2316, %v2575
        %s2609 = sadd.s32 %s2319, 36
        %s2610 = smul.addr %s2609, 4
        %s2611 = scalar_lea.vmem %s606, %s2610 [#allocation2]
        %v2612 = vld [vmem:[%s2611] sm:$0xf]
        %v2613 = vld [vmem:[%s2611 + $0x4] sm:$0xf]
        %v2614 = vld [vmem:[%s2611 + $0x8] sm:$0xf]
        %v2615 = vld [vmem:[%s2611 + $0xc] sm:$0xf]
        %v2616 = vld [vmem:[%s2611 + $0x10] sm:$0xf]
        %v2617 = vld [vmem:[%s2611 + $0x14] sm:$0xf]
        %v2618 = vld [vmem:[%s2611 + $0x18] sm:$0xf]
        %v2619 = vld [vmem:[%s2611 + $0x1c] sm:$0xf]
        %v2620 = vld [vmem:[%s2611 + $0x20] sm:$0xf]
        %v2621 = vld [vmem:[%s2611 + $0x24] sm:$0xf]
        %v2622 = vld [vmem:[%s2611 + $0x28] sm:$0xf]
        %v2623 = vld [vmem:[%s2611 + $0x2c] sm:$0xf]
        %v2624 = vld [vmem:[%s2611 + $0x30] sm:$0xf]
        %v2625 = vld [vmem:[%s2611 + $0x34] sm:$0xf]
        %v2626 = vld [vmem:[%s2611 + $0x38] sm:$0xf]
        %v2627 = vld [vmem:[%s2611 + $0x3c] sm:$0xf]
        %v2628 = vld [vmem:[%s2611 + $0x40] sm:$0xf]
        %v2629 = vld [vmem:[%s2611 + $0x44] sm:$0xf]
        %v2630 = vld [vmem:[%s2611 + $0x48] sm:$0xf]
        %v2631 = vld [vmem:[%s2611 + $0x4c] sm:$0xf]
        %v2632 = vld [vmem:[%s2611 + $0x50] sm:$0xf]
        %v2633 = vld [vmem:[%s2611 + $0x54] sm:$0xf]
        %v2634 = vld [vmem:[%s2611 + $0x58] sm:$0xf]
        %v2635 = vld [vmem:[%s2611 + $0x5c] sm:$0xf]
        %v2636 = vld [vmem:[%s2611 + $0x60] sm:$0xf]
        %v2637 = vld [vmem:[%s2611 + $0x64] sm:$0xf]
        %v2638 = vld [vmem:[%s2611 + $0x68] sm:$0xf]
        %v2639 = vld [vmem:[%s2611 + $0x6c] sm:$0xf]
        %v2640 = vld [vmem:[%s2611 + $0x70] sm:$0xf]
        %v2641 = vld [vmem:[%s2611 + $0x74] sm:$0xf]
        %v2642 = vld [vmem:[%s2611 + $0x78] sm:$0xf]
        %v2643 = vld [vmem:[%s2611 + $0x7c] sm:$0xf]
        %s2644 = scalar_lea.vmem %s1, 14
        %v2645 = vld [vmem:[%s2644] sm:$0x3]
        %v2678 = vunpack.c.l.b16 %v2612
        %v2679 = vunpack.c.l.b16 %v2613
        %v2680 = vunpack.c.l.b16 %v2614
        %v2681 = vunpack.c.l.b16 %v2615
        %v2682 = vunpack.c.l.b16 %v2616
        %v2683 = vunpack.c.l.b16 %v2617
        %v2684 = vunpack.c.l.b16 %v2618
        %v2685 = vunpack.c.l.b16 %v2619
        %v2686 = vunpack.c.l.b16 %v2620
        %v2687 = vunpack.c.l.b16 %v2621
        %v2688 = vunpack.c.l.b16 %v2622
        %v2689 = vunpack.c.l.b16 %v2623
        %v2690 = vunpack.c.l.b16 %v2624
        %v2691 = vunpack.c.l.b16 %v2625
        %v2692 = vunpack.c.l.b16 %v2626
        %v2693 = vunpack.c.l.b16 %v2627
        %v2694 = vunpack.c.l.b16 %v2628
        %v2695 = vunpack.c.l.b16 %v2629
        %v2696 = vunpack.c.l.b16 %v2630
        %v2697 = vunpack.c.l.b16 %v2631
        %v2698 = vunpack.c.l.b16 %v2632
        %v2699 = vunpack.c.l.b16 %v2633
        %v2700 = vunpack.c.l.b16 %v2634
        %v2701 = vunpack.c.l.b16 %v2635
        %v2702 = vunpack.c.l.b16 %v2636
        %v2703 = vunpack.c.l.b16 %v2637
        %v2704 = vunpack.c.l.b16 %v2638
        %v2705 = vunpack.c.l.b16 %v2639
        %v2706 = vunpack.c.l.b16 %v2640
        %v2707 = vunpack.c.l.b16 %v2641
        %v2708 = vunpack.c.l.b16 %v2642
        %v2709 = vunpack.c.l.b16 %v2643
        %v2710 = vpack.c.b16 %v2679, %v2678
        %v2711 = vpack.c.b16 %v2681, %v2680
        %v2712 = vpack.c.b16 %v2683, %v2682
        %v2713 = vpack.c.b16 %v2685, %v2684
        %v2714 = vpack.c.b16 %v2687, %v2686
        %v2715 = vpack.c.b16 %v2689, %v2688
        %v2716 = vpack.c.b16 %v2691, %v2690
        %v2717 = vpack.c.b16 %v2693, %v2692
        %v2718 = vpack.c.b16 %v2695, %v2694
        %v2719 = vpack.c.b16 %v2697, %v2696
        %v2720 = vpack.c.b16 %v2699, %v2698
        %v2721 = vpack.c.b16 %v2701, %v2700
        %v2722 = vpack.c.b16 %v2703, %v2702
        %v2723 = vpack.c.b16 %v2705, %v2704
        %v2724 = vpack.c.b16 %v2707, %v2706
        %v2725 = vpack.c.b16 %v2709, %v2708
        %v2727 = vsel %vm796, %v2710, 0
        %v2730 = vsel %vm796, %v2711, 0
        %v2733 = vsel %vm796, %v2712, 0
        %v2736 = vsel %vm796, %v2713, 0
        %v2739 = vsel %vm796, %v2714, 0
        %v2742 = vsel %vm796, %v2715, 0
        %v2745 = vsel %vm796, %v2716, 0
        %v2748 = vsel %vm796, %v2717, 0
        %v2751 = vsel %vm796, %v2718, 0
        %v2754 = vsel %vm796, %v2719, 0
        %v2757 = vsel %vm796, %v2720, 0
        %v2760 = vsel %vm796, %v2721, 0
        %v2763 = vsel %vm796, %v2722, 0
        %v2766 = vsel %vm796, %v2723, 0
        %v2769 = vsel %vm796, %v2724, 0
        %v2772 = vsel %vm796, %v2725, 0
        %v2775 = vsel %vm845, %v2645, 0
        %2777 = vmatpush.bf16.msra.mxu0 0
        %2778 = vmatpush.bf16.msra.mxu0 0
        %2779 = vmatpush.bf16.msra.mxu0 0
        %2780 = vmatpush.bf16.msra.mxu0 0
        %2781 = vmatpush.bf16.msra.mxu0 0
        %2782 = vmatpush.bf16.msra.mxu0 0
        %2783 = vmatpush.bf16.msra.mxu0 0
        %2784 = vmatpush.bf16.msra.mxu0 %v2775
        %2785 = vmatmul.bf16.gmra.mxu0 %v2727
        %v2786 = vpop.f32.mrf.mxu0
        %v2787 = vadd.f32 0.0, %v2786
        %v2788 = vpop.f32.mrf.mxu0
        %v2789 = vadd.f32 0.0, %v2788
        %2790 = vmatmul.bf16.gmra.mxu0 %v2730
        %v2791 = vpop.f32.mrf.mxu0
        %v2792 = vadd.f32 0.0, %v2791
        %v2793 = vpop.f32.mrf.mxu0
        %v2794 = vadd.f32 0.0, %v2793
        %2795 = vmatmul.bf16.gmra.mxu0 %v2733
        %v2796 = vpop.f32.mrf.mxu0
        %v2797 = vadd.f32 0.0, %v2796
        %v2798 = vpop.f32.mrf.mxu0
        %v2799 = vadd.f32 0.0, %v2798
        %2800 = vmatmul.bf16.gmra.mxu0 %v2736
        %v2801 = vpop.f32.mrf.mxu0
        %v2802 = vadd.f32 0.0, %v2801
        %v2803 = vpop.f32.mrf.mxu0
        %v2804 = vadd.f32 0.0, %v2803
        %2805 = vmatmul.bf16.gmra.mxu0 %v2739
        %v2806 = vpop.f32.mrf.mxu0
        %v2807 = vadd.f32 0.0, %v2806
        %v2808 = vpop.f32.mrf.mxu0
        %v2809 = vadd.f32 0.0, %v2808
        %2810 = vmatmul.bf16.gmra.mxu0 %v2742
        %v2811 = vpop.f32.mrf.mxu0
        %v2812 = vadd.f32 0.0, %v2811
        %v2813 = vpop.f32.mrf.mxu0
        %v2814 = vadd.f32 0.0, %v2813
        %2815 = vmatmul.bf16.gmra.mxu0 %v2745
        %v2816 = vpop.f32.mrf.mxu0
        %v2817 = vadd.f32 0.0, %v2816
        %v2818 = vpop.f32.mrf.mxu0
        %v2819 = vadd.f32 0.0, %v2818
        %2820 = vmatmul.bf16.gmra.mxu0 %v2748
        %v2821 = vpop.f32.mrf.mxu0
        %v2822 = vadd.f32 0.0, %v2821
        %v2823 = vpop.f32.mrf.mxu0
        %v2824 = vadd.f32 0.0, %v2823
        %2825 = vmatmul.bf16.gmra.mxu0 %v2751
        %v2826 = vpop.f32.mrf.mxu0
        %v2827 = vadd.f32 0.0, %v2826
        %v2828 = vpop.f32.mrf.mxu0
        %v2829 = vadd.f32 0.0, %v2828
        %2830 = vmatmul.bf16.gmra.mxu0 %v2754
        %v2831 = vpop.f32.mrf.mxu0
        %v2832 = vadd.f32 0.0, %v2831
        %v2833 = vpop.f32.mrf.mxu0
        %v2834 = vadd.f32 0.0, %v2833
        %2835 = vmatmul.bf16.gmra.mxu0 %v2757
        %v2836 = vpop.f32.mrf.mxu0
        %v2837 = vadd.f32 0.0, %v2836
        %v2838 = vpop.f32.mrf.mxu0
        %v2839 = vadd.f32 0.0, %v2838
        %2840 = vmatmul.bf16.gmra.mxu0 %v2760
        %v2841 = vpop.f32.mrf.mxu0
        %v2842 = vadd.f32 0.0, %v2841
        %v2843 = vpop.f32.mrf.mxu0
        %v2844 = vadd.f32 0.0, %v2843
        %2845 = vmatmul.bf16.gmra.mxu0 %v2763
        %v2846 = vpop.f32.mrf.mxu0
        %v2847 = vadd.f32 0.0, %v2846
        %v2848 = vpop.f32.mrf.mxu0
        %v2849 = vadd.f32 0.0, %v2848
        %2850 = vmatmul.bf16.gmra.mxu0 %v2766
        %v2851 = vpop.f32.mrf.mxu0
        %v2852 = vadd.f32 0.0, %v2851
        %v2853 = vpop.f32.mrf.mxu0
        %v2854 = vadd.f32 0.0, %v2853
        %2855 = vmatmul.bf16.gmra.mxu0 %v2769
        %v2856 = vpop.f32.mrf.mxu0
        %v2857 = vadd.f32 0.0, %v2856
        %v2858 = vpop.f32.mrf.mxu0
        %v2859 = vadd.f32 0.0, %v2858
        %2860 = vmatmul.bf16.gmra.mxu0 %v2772
        %v2861 = vpop.f32.mrf.mxu0
        %v2862 = vadd.f32 0.0, %v2861
        %v2863 = vpop.f32.mrf.mxu0
        %v2864 = vadd.f32 0.0, %v2863
        %2865 = vdwg.mxu0
        %v2866 = vadd.f32 %v2577, %v2787
        %v2867 = vadd.f32 %v2578, %v2789
        %v2868 = vadd.f32 %v2579, %v2792
        %v2869 = vadd.f32 %v2580, %v2794
        %v2870 = vadd.f32 %v2581, %v2797
        %v2871 = vadd.f32 %v2582, %v2799
        %v2872 = vadd.f32 %v2583, %v2802
        %v2873 = vadd.f32 %v2584, %v2804
        %v2874 = vadd.f32 %v2585, %v2807
        %v2875 = vadd.f32 %v2586, %v2809
        %v2876 = vadd.f32 %v2587, %v2812
        %v2877 = vadd.f32 %v2588, %v2814
        %v2878 = vadd.f32 %v2589, %v2817
        %v2879 = vadd.f32 %v2590, %v2819
        %v2880 = vadd.f32 %v2591, %v2822
        %v2881 = vadd.f32 %v2592, %v2824
        %v2882 = vadd.f32 %v2593, %v2827
        %v2883 = vadd.f32 %v2594, %v2829
        %v2884 = vadd.f32 %v2595, %v2832
        %v2885 = vadd.f32 %v2596, %v2834
        %v2886 = vadd.f32 %v2597, %v2837
        %v2887 = vadd.f32 %v2598, %v2839
        %v2888 = vadd.f32 %v2599, %v2842
        %v2889 = vadd.f32 %v2600, %v2844
        %v2890 = vadd.f32 %v2601, %v2847
        %v2891 = vadd.f32 %v2602, %v2849
        %v2892 = vadd.f32 %v2603, %v2852
        %v2893 = vadd.f32 %v2604, %v2854
        %v2894 = vadd.f32 %v2605, %v2857
        %v2895 = vadd.f32 %v2606, %v2859
        %v2896 = vadd.f32 %v2607, %v2862
        %v2897 = vadd.f32 %v2608, %v2864
        %s2898 = sadd.s32 %s2319, 72
        %s2899 = smul.addr %s2898, 4
        %s2900 = scalar_lea.vmem %s606, %s2899 [#allocation2]
        %v2901 = vld [vmem:[%s2900] sm:$0xf]
        %v2902 = vld [vmem:[%s2900 + $0x4] sm:$0xf]
        %v2903 = vld [vmem:[%s2900 + $0x8] sm:$0xf]
        %v2904 = vld [vmem:[%s2900 + $0xc] sm:$0xf]
        %v2905 = vld [vmem:[%s2900 + $0x10] sm:$0xf]
        %v2906 = vld [vmem:[%s2900 + $0x14] sm:$0xf]
        %v2907 = vld [vmem:[%s2900 + $0x18] sm:$0xf]
        %v2908 = vld [vmem:[%s2900 + $0x1c] sm:$0xf]
        %v2909 = vld [vmem:[%s2900 + $0x20] sm:$0xf]
        %v2910 = vld [vmem:[%s2900 + $0x24] sm:$0xf]
        %v2911 = vld [vmem:[%s2900 + $0x28] sm:$0xf]
        %v2912 = vld [vmem:[%s2900 + $0x2c] sm:$0xf]
        %v2913 = vld [vmem:[%s2900 + $0x30] sm:$0xf]
        %v2914 = vld [vmem:[%s2900 + $0x34] sm:$0xf]
        %v2915 = vld [vmem:[%s2900 + $0x38] sm:$0xf]
        %v2916 = vld [vmem:[%s2900 + $0x3c] sm:$0xf]
        %v2917 = vld [vmem:[%s2900 + $0x40] sm:$0xf]
        %v2918 = vld [vmem:[%s2900 + $0x44] sm:$0xf]
        %v2919 = vld [vmem:[%s2900 + $0x48] sm:$0xf]
        %v2920 = vld [vmem:[%s2900 + $0x4c] sm:$0xf]
        %v2921 = vld [vmem:[%s2900 + $0x50] sm:$0xf]
        %v2922 = vld [vmem:[%s2900 + $0x54] sm:$0xf]
        %v2923 = vld [vmem:[%s2900 + $0x58] sm:$0xf]
        %v2924 = vld [vmem:[%s2900 + $0x5c] sm:$0xf]
        %v2925 = vld [vmem:[%s2900 + $0x60] sm:$0xf]
        %v2926 = vld [vmem:[%s2900 + $0x64] sm:$0xf]
        %v2927 = vld [vmem:[%s2900 + $0x68] sm:$0xf]
        %v2928 = vld [vmem:[%s2900 + $0x6c] sm:$0xf]
        %v2929 = vld [vmem:[%s2900 + $0x70] sm:$0xf]
        %v2930 = vld [vmem:[%s2900 + $0x74] sm:$0xf]
        %v2931 = vld [vmem:[%s2900 + $0x78] sm:$0xf]
        %v2932 = vld [vmem:[%s2900 + $0x7c] sm:$0xf]
        %s2933 = scalar_lea.vmem %s1, 16
        %v2934 = vld [vmem:[%s2933] sm:$0x3]
        %v2967 = vunpack.c.l.b16 %v2901
        %v2968 = vunpack.c.l.b16 %v2902
        %v2969 = vunpack.c.l.b16 %v2903
        %v2970 = vunpack.c.l.b16 %v2904
        %v2971 = vunpack.c.l.b16 %v2905
        %v2972 = vunpack.c.l.b16 %v2906
        %v2973 = vunpack.c.l.b16 %v2907
        %v2974 = vunpack.c.l.b16 %v2908
        %v2975 = vunpack.c.l.b16 %v2909
        %v2976 = vunpack.c.l.b16 %v2910
        %v2977 = vunpack.c.l.b16 %v2911
        %v2978 = vunpack.c.l.b16 %v2912
        %v2979 = vunpack.c.l.b16 %v2913
        %v2980 = vunpack.c.l.b16 %v2914
        %v2981 = vunpack.c.l.b16 %v2915
        %v2982 = vunpack.c.l.b16 %v2916
        %v2983 = vunpack.c.l.b16 %v2917
        %v2984 = vunpack.c.l.b16 %v2918
        %v2985 = vunpack.c.l.b16 %v2919
        %v2986 = vunpack.c.l.b16 %v2920
        %v2987 = vunpack.c.l.b16 %v2921
        %v2988 = vunpack.c.l.b16 %v2922
        %v2989 = vunpack.c.l.b16 %v2923
        %v2990 = vunpack.c.l.b16 %v2924
        %v2991 = vunpack.c.l.b16 %v2925
        %v2992 = vunpack.c.l.b16 %v2926
        %v2993 = vunpack.c.l.b16 %v2927
        %v2994 = vunpack.c.l.b16 %v2928
        %v2995 = vunpack.c.l.b16 %v2929
        %v2996 = vunpack.c.l.b16 %v2930
        %v2997 = vunpack.c.l.b16 %v2931
        %v2998 = vunpack.c.l.b16 %v2932
        %v2999 = vpack.c.b16 %v2968, %v2967
        %v3000 = vpack.c.b16 %v2970, %v2969
        %v3001 = vpack.c.b16 %v2972, %v2971
        %v3002 = vpack.c.b16 %v2974, %v2973
        %v3003 = vpack.c.b16 %v2976, %v2975
        %v3004 = vpack.c.b16 %v2978, %v2977
        %v3005 = vpack.c.b16 %v2980, %v2979
        %v3006 = vpack.c.b16 %v2982, %v2981
        %v3007 = vpack.c.b16 %v2984, %v2983
        %v3008 = vpack.c.b16 %v2986, %v2985
        %v3009 = vpack.c.b16 %v2988, %v2987
        %v3010 = vpack.c.b16 %v2990, %v2989
        %v3011 = vpack.c.b16 %v2992, %v2991
        %v3012 = vpack.c.b16 %v2994, %v2993
        %v3013 = vpack.c.b16 %v2996, %v2995
        %v3014 = vpack.c.b16 %v2998, %v2997
        %v3016 = vsel %vm796, %v2999, 0
        %v3019 = vsel %vm796, %v3000, 0
        %v3022 = vsel %vm796, %v3001, 0
        %v3025 = vsel %vm796, %v3002, 0
        %v3028 = vsel %vm796, %v3003, 0
        %v3031 = vsel %vm796, %v3004, 0
        %v3034 = vsel %vm796, %v3005, 0
        %v3037 = vsel %vm796, %v3006, 0
        %v3040 = vsel %vm796, %v3007, 0
        %v3043 = vsel %vm796, %v3008, 0
        %v3046 = vsel %vm796, %v3009, 0
        %v3049 = vsel %vm796, %v3010, 0
        %v3052 = vsel %vm796, %v3011, 0
        %v3055 = vsel %vm796, %v3012, 0
        %v3058 = vsel %vm796, %v3013, 0
        %v3061 = vsel %vm796, %v3014, 0
        %v3064 = vsel %vm845, %v2934, 0
        %3066 = vmatpush.bf16.msra.mxu0 0
        %3067 = vmatpush.bf16.msra.mxu0 0
        %3068 = vmatpush.bf16.msra.mxu0 0
        %3069 = vmatpush.bf16.msra.mxu0 0
        %3070 = vmatpush.bf16.msra.mxu0 0
        %3071 = vmatpush.bf16.msra.mxu0 0
        %3072 = vmatpush.bf16.msra.mxu0 0
        %3073 = vmatpush.bf16.msra.mxu0 %v3064
        %3074 = vmatmul.bf16.gmra.mxu0 %v3016
        %v3075 = vpop.f32.mrf.mxu0
        %v3076 = vadd.f32 0.0, %v3075
        %v3077 = vpop.f32.mrf.mxu0
        %v3078 = vadd.f32 0.0, %v3077
        %3079 = vmatmul.bf16.gmra.mxu0 %v3019
        %v3080 = vpop.f32.mrf.mxu0
        %v3081 = vadd.f32 0.0, %v3080
        %v3082 = vpop.f32.mrf.mxu0
        %v3083 = vadd.f32 0.0, %v3082
        %3084 = vmatmul.bf16.gmra.mxu0 %v3022
        %v3085 = vpop.f32.mrf.mxu0
        %v3086 = vadd.f32 0.0, %v3085
        %v3087 = vpop.f32.mrf.mxu0
        %v3088 = vadd.f32 0.0, %v3087
        %3089 = vmatmul.bf16.gmra.mxu0 %v3025
        %v3090 = vpop.f32.mrf.mxu0
        %v3091 = vadd.f32 0.0, %v3090
        %v3092 = vpop.f32.mrf.mxu0
        %v3093 = vadd.f32 0.0, %v3092
        %3094 = vmatmul.bf16.gmra.mxu0 %v3028
        %v3095 = vpop.f32.mrf.mxu0
        %v3096 = vadd.f32 0.0, %v3095
        %v3097 = vpop.f32.mrf.mxu0
        %v3098 = vadd.f32 0.0, %v3097
        %3099 = vmatmul.bf16.gmra.mxu0 %v3031
        %v3100 = vpop.f32.mrf.mxu0
        %v3101 = vadd.f32 0.0, %v3100
        %v3102 = vpop.f32.mrf.mxu0
        %v3103 = vadd.f32 0.0, %v3102
        %3104 = vmatmul.bf16.gmra.mxu0 %v3034
        %v3105 = vpop.f32.mrf.mxu0
        %v3106 = vadd.f32 0.0, %v3105
        %v3107 = vpop.f32.mrf.mxu0
        %v3108 = vadd.f32 0.0, %v3107
        %3109 = vmatmul.bf16.gmra.mxu0 %v3037
        %v3110 = vpop.f32.mrf.mxu0
        %v3111 = vadd.f32 0.0, %v3110
        %v3112 = vpop.f32.mrf.mxu0
        %v3113 = vadd.f32 0.0, %v3112
        %3114 = vmatmul.bf16.gmra.mxu0 %v3040
        %v3115 = vpop.f32.mrf.mxu0
        %v3116 = vadd.f32 0.0, %v3115
        %v3117 = vpop.f32.mrf.mxu0
        %v3118 = vadd.f32 0.0, %v3117
        %3119 = vmatmul.bf16.gmra.mxu0 %v3043
        %v3120 = vpop.f32.mrf.mxu0
        %v3121 = vadd.f32 0.0, %v3120
        %v3122 = vpop.f32.mrf.mxu0
        %v3123 = vadd.f32 0.0, %v3122
        %3124 = vmatmul.bf16.gmra.mxu0 %v3046
        %v3125 = vpop.f32.mrf.mxu0
        %v3126 = vadd.f32 0.0, %v3125
        %v3127 = vpop.f32.mrf.mxu0
        %v3128 = vadd.f32 0.0, %v3127
        %3129 = vmatmul.bf16.gmra.mxu0 %v3049
        %v3130 = vpop.f32.mrf.mxu0
        %v3131 = vadd.f32 0.0, %v3130
        %v3132 = vpop.f32.mrf.mxu0
        %v3133 = vadd.f32 0.0, %v3132
        %3134 = vmatmul.bf16.gmra.mxu0 %v3052
        %v3135 = vpop.f32.mrf.mxu0
        %v3136 = vadd.f32 0.0, %v3135
        %v3137 = vpop.f32.mrf.mxu0
        %v3138 = vadd.f32 0.0, %v3137
        %3139 = vmatmul.bf16.gmra.mxu0 %v3055
        %v3140 = vpop.f32.mrf.mxu0
        %v3141 = vadd.f32 0.0, %v3140
        %v3142 = vpop.f32.mrf.mxu0
        %v3143 = vadd.f32 0.0, %v3142
        %3144 = vmatmul.bf16.gmra.mxu0 %v3058
        %v3145 = vpop.f32.mrf.mxu0
        %v3146 = vadd.f32 0.0, %v3145
        %v3147 = vpop.f32.mrf.mxu0
        %v3148 = vadd.f32 0.0, %v3147
        %3149 = vmatmul.bf16.gmra.mxu0 %v3061
        %v3150 = vpop.f32.mrf.mxu0
        %v3151 = vadd.f32 0.0, %v3150
        %v3152 = vpop.f32.mrf.mxu0
        %v3153 = vadd.f32 0.0, %v3152
        %3154 = vdwg.mxu0
        %v3155 = vadd.f32 %v2866, %v3076
        %v3156 = vadd.f32 %v2867, %v3078
        %v3157 = vadd.f32 %v2868, %v3081
        %v3158 = vadd.f32 %v2869, %v3083
        %v3159 = vadd.f32 %v2870, %v3086
        %v3160 = vadd.f32 %v2871, %v3088
        %v3161 = vadd.f32 %v2872, %v3091
        %v3162 = vadd.f32 %v2873, %v3093
        %v3163 = vadd.f32 %v2874, %v3096
        %v3164 = vadd.f32 %v2875, %v3098
        %v3165 = vadd.f32 %v2876, %v3101
        %v3166 = vadd.f32 %v2877, %v3103
        %v3167 = vadd.f32 %v2878, %v3106
        %v3168 = vadd.f32 %v2879, %v3108
        %v3169 = vadd.f32 %v2880, %v3111
        %v3170 = vadd.f32 %v2881, %v3113
        %v3171 = vadd.f32 %v2882, %v3116
        %v3172 = vadd.f32 %v2883, %v3118
        %v3173 = vadd.f32 %v2884, %v3121
        %v3174 = vadd.f32 %v2885, %v3123
        %v3175 = vadd.f32 %v2886, %v3126
        %v3176 = vadd.f32 %v2887, %v3128
        %v3177 = vadd.f32 %v2888, %v3131
        %v3178 = vadd.f32 %v2889, %v3133
        %v3179 = vadd.f32 %v2890, %v3136
        %v3180 = vadd.f32 %v2891, %v3138
        %v3181 = vadd.f32 %v2892, %v3141
        %v3182 = vadd.f32 %v2893, %v3143
        %v3183 = vadd.f32 %v2894, %v3146
        %v3184 = vadd.f32 %v2895, %v3148
        %v3185 = vadd.f32 %v2896, %v3151
        %v3186 = vadd.f32 %v2897, %v3153
        %vm3187 = vcmask 64512
        %3188 = vst.msk [vmem:[%s637] sm:$0xff] %vm3187, %v3155
        %3189 = vst.msk [vmem:[%s637 + $0x8] sm:$0xff] %vm3187, %v3156
        %3190 = vst.msk [vmem:[%s637 + $0x10] sm:$0xff] %vm3187, %v3157
        %3191 = vst.msk [vmem:[%s637 + $0x18] sm:$0xff] %vm3187, %v3158
        %3192 = vst.msk [vmem:[%s637 + $0x20] sm:$0xff] %vm3187, %v3159
        %3193 = vst.msk [vmem:[%s637 + $0x28] sm:$0xff] %vm3187, %v3160
        %3194 = vst.msk [vmem:[%s637 + $0x30] sm:$0xff] %vm3187, %v3161
        %3195 = vst.msk [vmem:[%s637 + $0x38] sm:$0xff] %vm3187, %v3162
        %3196 = vst.msk [vmem:[%s637 + $0x40] sm:$0xff] %vm3187, %v3163
        %3197 = vst.msk [vmem:[%s637 + $0x48] sm:$0xff] %vm3187, %v3164
        %3198 = vst.msk [vmem:[%s637 + $0x50] sm:$0xff] %vm3187, %v3165
        %3199 = vst.msk [vmem:[%s637 + $0x58] sm:$0xff] %vm3187, %v3166
        %3200 = vst.msk [vmem:[%s637 + $0x60] sm:$0xff] %vm3187, %v3167
        %3201 = vst.msk [vmem:[%s637 + $0x68] sm:$0xff] %vm3187, %v3168
        %3202 = vst.msk [vmem:[%s637 + $0x70] sm:$0xff] %vm3187, %v3169
        %3203 = vst.msk [vmem:[%s637 + $0x78] sm:$0xff] %vm3187, %v3170
        %3204 = vst.msk [vmem:[%s637 + $0x80] sm:$0xff] %vm3187, %v3171
        %3205 = vst.msk [vmem:[%s637 + $0x88] sm:$0xff] %vm3187, %v3172
        %3206 = vst.msk [vmem:[%s637 + $0x90] sm:$0xff] %vm3187, %v3173
        %3207 = vst.msk [vmem:[%s637 + $0x98] sm:$0xff] %vm3187, %v3174
        %3208 = vst.msk [vmem:[%s637 + $0xa0] sm:$0xff] %vm3187, %v3175
        %3209 = vst.msk [vmem:[%s637 + $0xa8] sm:$0xff] %vm3187, %v3176
        %3210 = vst.msk [vmem:[%s637 + $0xb0] sm:$0xff] %vm3187, %v3177
        %3211 = vst.msk [vmem:[%s637 + $0xb8] sm:$0xff] %vm3187, %v3178
        %3212 = vst.msk [vmem:[%s637 + $0xc0] sm:$0xff] %vm3187, %v3179
        %3213 = vst.msk [vmem:[%s637 + $0xc8] sm:$0xff] %vm3187, %v3180
        %3214 = vst.msk [vmem:[%s637 + $0xd0] sm:$0xff] %vm3187, %v3181
        %3215 = vst.msk [vmem:[%s637 + $0xd8] sm:$0xff] %vm3187, %v3182
        %3216 = vst.msk [vmem:[%s637 + $0xe0] sm:$0xff] %vm3187, %v3183
        %3217 = vst.msk [vmem:[%s637 + $0xe8] sm:$0xff] %vm3187, %v3184
        %3218 = vst.msk [vmem:[%s637 + $0xf0] sm:$0xff] %vm3187, %v3185
        %3219 = vst.msk [vmem:[%s637 + $0xf8] sm:$0xff] %vm3187, %v3186
        %s3220 = smul.u32 32, %s18
        %p3221 = scmp.lt.s32.totalorder %s17, 1
        %s3222 = scalar_select %p3221, %s17, 1
        %p3223 = scmp.lt.s32.totalorder %s3220, 31
        %s3224 = scalar_select %p3223, %s3220, 31
        %s3225 = smul.addr %s3222, 32
        %s3226 = sadd.s32 %s3224, %s3225
        %s3227 = smul.addr %s3226, 8
        %s3228 = scalar_lea.vmem %s2, %s3227
        // Predicated region
        $region70: #{tpu_custom_call.1} parent=64 // pred_check
          %p3229 = pneg %p92
        $region71: #{tpu_custom_call.1} parent=64 // pred_check_branch
          %3231 = sbr.rel (%p3229) target = $region73
        $region72: #{tpu_custom_call.1} parent=64 // pred_region
          %s3232 = smul.u32 32, %s18
        $region73: #{tpu_custom_call.1} parent=64 // pred_fallthru
          _
      $region65: #{tpu_custom_call.1} parent=5 // pred_fallthru
        _
      %p3233 = scmp.le.s32.totalorder 2, %s8
      // Predicated region
      $region74: #{tpu_custom_call.1} parent=5 // pred_check
        %p3234 = pneg %p3233
      $region75: #{tpu_custom_call.1} parent=5 // pred_check_branch
        %3236 = sbr.rel (%p3234) target = $region77
      $region76: #{tpu_custom_call.1} parent=5 // pred_region
        %s3237 = ssub.s32 %s8, 2
        // Predicated region
        $region78: #{tpu_custom_call.1} parent=76 // pred_check
          %p3238 = pneg %p98
        $region79: #{tpu_custom_call.1} parent=76 // pred_check_branch
          %3240 = sbr.rel (%p3238) target = $region81
        $region80: #{tpu_custom_call.1} parent=76 // pred_region
          %s3241 = smul.u32 32, %s20
          %p3242 = scmp.lt.s32.totalorder %s19, 1
          %s3243 = scalar_select %p3242, %s19, 1
          %p3244 = scmp.lt.s32.totalorder %s3241, 31
          %s3245 = scalar_select %p3244, %s3241, 31
          %s3246 = smul.addr %s3243, 32
          %s3247 = sadd.s32 %s3245, %s3246
          %s3248 = smul.addr %s3247, 8
          %s3249 = scalar_lea.vmem %s2, %s3248
        $region81: #{tpu_custom_call.1} parent=76 // pred_fallthru
          _
      $region77: #{tpu_custom_call.1} parent=5 // pred_fallthru
        _
    $region6: #{tpu_custom_call.1} parent=1 // loop_footer
      %s12 = sadd.s32 1, %s8
    $region7: #{tpu_custom_call.1} parent=1 // loop_footer_branch
      %7 = sbr.rel target = $region3
    $region8: #{tpu_custom_call.1} parent=1 // loop_exit
      _

</llo_original>
